<compile_context>
chip_gen: v6e
topology: v6e:2x2x1
jax: 0.10.0
libtpu: 0.0.40
codegen_flags: <defaults>
</compile_context>

<pallas_src>
import jax
import jax.numpy as jnp
from jax.experimental import pallas as pl
from jax.experimental.pallas import tpu as pltpu

HIDDEN = 256


def _mlp_kernel(xT_ref, w1T_ref, b1_ref, w2_ref, b2_ref, o_ref):
    # xT_ref:  (2C, tile_n)   channels-major input block (lane-dense rows)
    # w1T_ref: (HIDDEN, 2C)   transposed layer-1 weight
    # b1_ref:  (HIDDEN, 1)    layer-1 bias (lane-broadcast)
    # w2_ref:  (HIDDEN, 1)    layer-2 weight (lane-broadcast)
    # b2_ref:  (1,) f32 SMEM  layer-2 bias scalar
    # o_ref:   (1, tile_n)    lane-dense output row block

    # Layer 1: single fused K=2C matmul, already in (HIDDEN, tile_n) orientation.
    h = jnp.dot(w1T_ref[...], xT_ref[...], preferred_element_type=jnp.float32)
    h = h + b1_ref[...]
    # TODO(synk): Dropout(inplace=True) is identity in eval mode; no-op here.
    h = jnp.maximum(h, 0.0)                                  # ReLU, (HIDDEN, tile_n)

    # Layer 2 (256 -> 1): per-sublane scale (VPU) + sublane-axis reduction.
    # No XLU transpose, no 1-column MXU matmul; result is lane-dense.
    y = jnp.sum(h * w2_ref[...], axis=0, keepdims=True) + b2_ref[0]   # (1, tile_n)

    o_ref[...] = 1.0 / (1.0 + jnp.exp(-y))                   # sigmoid (exp on EUP)


def connection_predictor_forward(e1, e2, w1, b1, w2, b2, *, tile_n=4096):
    """e1, e2: (N, C); w1: (2C, 256); b1: (256,); w2: (256, 1); b2: (1,).

    Returns (N,) float32 sigmoid probabilities (matches the PyTorch module).
    """
    assert tile_n > 0 and tile_n % 128 == 0, "tile_n must be a multiple of 128"
    n, c = e1.shape
    assert e2.shape == (n, c)
    two_c = 2 * c

    # Keep >= 2 grid steps when possible (v7x megacore); stay a multiple of 128.
    max_tile = max(128, -(-((n + 1) // 2) // 128) * 128)
    tile_n = max(128, min(tile_n, max_tile))
    n_pad = -(-n // tile_n) * tile_n

    # One-time wrapper-side relayout: channels-major stacked input (2C, N).
    # Row order matches the columns of cat([e1, e2], dim=1).
    xT = jnp.concatenate(
        (jnp.asarray(e1, jnp.float32).T, jnp.asarray(e2, jnp.float32).T), axis=0)
    if n_pad != n:
        # Padded columns produce sigmoid(bias) garbage; sliced off at the end.
        xT = jnp.pad(xT, ((0, 0), (0, n_pad - n)))

    w1T = jnp.asarray(w1, jnp.float32).T                     # (256, 2C)
    b1_col = jnp.asarray(b1, jnp.float32).reshape(HIDDEN, 1)
    w2_col = jnp.asarray(w2, jnp.float32).reshape(HIDDEN, 1)
    b2_1d = jnp.asarray(b2, jnp.float32).reshape(1)

    out = pl.pallas_call(
        _mlp_kernel,
        out_shape=jax.ShapeDtypeStruct((1, n_pad), jnp.float32),
        grid_spec=pltpu.PrefetchScalarGridSpec(
            num_scalar_prefetch=0,
            grid=(n_pad // tile_n,),
            in_specs=[
                pl.BlockSpec((two_c, tile_n), lambda i: (0, i)),    # xT block
                pl.BlockSpec((HIDDEN, two_c), lambda i: (0, 0)),    # W1^T
                pl.BlockSpec((HIDDEN, 1), lambda i: (0, 0)),        # b1 column
                pl.BlockSpec((HIDDEN, 1), lambda i: (0, 0)),        # w2 column
                pl.BlockSpec(memory_space=pltpu.MemorySpace.SMEM),  # b2 scalar
            ],
            out_specs=pl.BlockSpec((1, tile_n), lambda i: (0, i)),  # lane-dense
        ),
        compiler_params=pltpu.CompilerParams(
            dimension_semantics=("parallel",),
        ),
    )(xT, w1T, b1_col, w2_col, b2_1d)

    return out.reshape(-1)[:n]


def reference_forward(e1, e2, w1, b1, w2, b2):
    x = jnp.concatenate((e1, e2), axis=1)
    h = jnp.maximum(x @ w1 + b1, 0.0)
    y = h @ w2.reshape(HIDDEN, 1) + b2
    return jax.nn.sigmoid(y).reshape(-1)


if __name__ == "__main__":
    # input_channels = 4 -> MLP input = 8. N deliberately not a tile multiple
    # to exercise the padding/slicing path; the wrapper caps the tile so the
    # grid has 2 steps (512 rows each).
    N, C = 1000, 4
    key = jax.random.PRNGKey(0)
    k1, k2, k3, k4, k5, k6 = jax.random.split(key, 6)

    e1 = jax.random.normal(k1, (N, C), jnp.float32)
    e2 = jax.random.normal(k2, (N, C), jnp.float32)

    # Deterministic synthetic parameters (not a checkpoint load).
    w1 = jax.random.normal(k3, (2 * C, HIDDEN), jnp.float32) * 0.1
    b1 = jax.random.normal(k4, (HIDDEN,), jnp.float32) * 0.01
    w2 = jax.random.normal(k5, (HIDDEN, 1), jnp.float32) * 0.1
    b2 = jax.random.normal(k6, (1,), jnp.float32) * 0.01

    out = connection_predictor_forward(e1, e2, w1, b1, w2, b2)
    out = jax.block_until_ready(out)

    ref = reference_forward(e1, e2, w1, b1, w2, b2)
    assert out.shape == (N,)
    assert jnp.allclose(out, ref, atol=1e-5, rtol=1e-5)

    print("KERNEL_OK")
</pallas_src>

<mosaic_0001>
module attributes {stable_mosaic.version = 11 : i64} {
  func.func @_mlp_kernel(%arg0: i32, %arg1: memref<8x512xf32, #tpu.memory_space<vmem>>, %arg2: memref<256x8xf32, #tpu.memory_space<vmem>>, %arg3: memref<256x1xf32, #tpu.memory_space<vmem>>, %arg4: memref<256x1xf32, #tpu.memory_space<vmem>>, %arg5: memref<1xf32, #tpu.memory_space<smem>>, %arg6: memref<1x512xf32, #tpu.memory_space<vmem>>) attributes {dimension_semantics = [#tpu.dimension_semantics<parallel>], iteration_bounds = array<i64: 2>, scalar_prefetch = 0 : i64, scratch_operands = 0 : i64, tpu.core_type = #tpu.core_type<tc>, window_params = [{transform_indices = @transform_0, window_bounds = array<i64: 8, 512>}, {pipeline_mode = #tpu.pipeline_mode<synchronous>, transform_indices = @transform_1, window_bounds = array<i64: 256, 8>}, {pipeline_mode = #tpu.pipeline_mode<synchronous>, transform_indices = @transform_2, window_bounds = array<i64: 256, 1>}, {pipeline_mode = #tpu.pipeline_mode<synchronous>, transform_indices = @transform_3, window_bounds = array<i64: 256, 1>}, {transform_indices = @transform_4, window_bounds = array<i64: 1>}, {transform_indices = @transform_5, window_bounds = array<i64: 1, 512>}]} {
    %c0 = arith.constant 0 : index
    %c0_0 = arith.constant 0 : index
    %0 = vector.load %arg2[%c0, %c0_0] : memref<256x8xf32, #tpu.memory_space<vmem>>, vector<256x8xf32>
    %c0_1 = arith.constant 0 : index
    %c0_2 = arith.constant 0 : index
    %1 = vector.load %arg1[%c0_1, %c0_2] : memref<8x512xf32, #tpu.memory_space<vmem>>, vector<8x512xf32>
    %cst = arith.constant dense<0.000000e+00> : vector<256x512xf32>
    %2 = tpu.matmul %0, %1, %cst {dimension_numbers = #tpu.dot_dimension_numbers<[1], [0], [0], [1], [0, 0, 1, 1], [], []>} : vector<256x8xf32>, vector<8x512xf32>, vector<256x512xf32> -> vector<256x512xf32>
    %c0_3 = arith.constant 0 : index
    %c0_4 = arith.constant 0 : index
    %3 = vector.load %arg3[%c0_3, %c0_4] : memref<256x1xf32, #tpu.memory_space<vmem>>, vector<256x1xf32>
    %4 = vector.broadcast %3 : vector<256x1xf32> to vector<256x512xf32>
    %5 = arith.addf %2, %4 : vector<256x512xf32>
    %cst_5 = arith.constant 0.000000e+00 : f32
    %6 = vector.broadcast %cst_5 : f32 to vector<256x512xf32>
    %7 = arith.maximumf %5, %6 : vector<256x512xf32>
    %c0_6 = arith.constant 0 : index
    %c0_7 = arith.constant 0 : index
    %8 = vector.load %arg4[%c0_6, %c0_7] : memref<256x1xf32, #tpu.memory_space<vmem>>, vector<256x1xf32>
    %9 = vector.broadcast %8 : vector<256x1xf32> to vector<256x512xf32>
    %10 = arith.mulf %7, %9 : vector<256x512xf32>
    %cst_8 = arith.constant dense<0.000000e+00> : vector<512xf32>
    %11 = vector.multi_reduction <add>, %10, %cst_8 [0] : vector<256x512xf32> to vector<512xf32>
    %12 = vector.shape_cast %11 : vector<512xf32> to vector<1x512xf32>
    %c0_9 = arith.constant 0 : index
    %13 = memref.load %arg5[%c0_9] : memref<1xf32, #tpu.memory_space<smem>>
    %14 = vector.broadcast %13 : f32 to vector<1x512xf32>
    %15 = arith.addf %12, %14 : vector<1x512xf32>
    %cst_10 = arith.constant 0.000000e+00 : f32
    %16 = vector.broadcast %cst_10 : f32 to vector<1x512xf32>
    %17 = arith.subf %16, %15 : vector<1x512xf32>
    %18 = math.exp %17 : vector<1x512xf32>
    %cst_11 = arith.constant 1.000000e+00 : f32
    %19 = vector.broadcast %cst_11 : f32 to vector<1x512xf32>
    %20 = arith.addf %19, %18 : vector<1x512xf32>
    %cst_12 = arith.constant 1.000000e+00 : f32
    %21 = vector.broadcast %cst_12 : f32 to vector<1x512xf32>
    %22 = arith.divf %21, %20 : vector<1x512xf32>
    %c0_13 = arith.constant 0 : index
    %c0_14 = arith.constant 0 : index
    %23 = vector.load %arg6[%c0_13, %c0_14] : memref<1x512xf32, #tpu.memory_space<vmem>>, vector<1x512xf32>
    tpu.vector_store %arg6[%c0_13, %c0_14], %22 {strides = array<i32>} : memref<1x512xf32, #tpu.memory_space<vmem>>, vector<1x512xf32>,
    return
  }
  func.func @transform_0(%arg0: i32) -> (i32, i32) {
    %c0_i32 = arith.constant 0 : i32
    %c0_i32_0 = arith.constant 0 : i32
    return %c0_i32, %arg0 : i32, i32
  }
  func.func @transform_1(%arg0: i32) -> (i32, i32) {
    %c0_i32 = arith.constant 0 : i32
    %c0_i32_0 = arith.constant 0 : i32
    %c0_i32_1 = arith.constant 0 : i32
    return %c0_i32, %c0_i32_0 : i32, i32
  }
  func.func @transform_2(%arg0: i32) -> (i32, i32) {
    %c0_i32 = arith.constant 0 : i32
    %c0_i32_0 = arith.constant 0 : i32
    %c0_i32_1 = arith.constant 0 : i32
    return %c0_i32, %c0_i32_0 : i32, i32
  }
  func.func @transform_3(%arg0: i32) -> (i32, i32) {
    %c0_i32 = arith.constant 0 : i32
    %c0_i32_0 = arith.constant 0 : i32
    %c0_i32_1 = arith.constant 0 : i32
    return %c0_i32, %c0_i32_0 : i32, i32
  }
  func.func @transform_4(%arg0: i32) -> i32 {
    %c0_i32 = arith.constant 0 : i32
    %c0_i32_0 = arith.constant 0 : i32
    return %c0_i32 : i32
  }
  func.func @transform_5(%arg0: i32) -> (i32, i32) {
    %c0_i32 = arith.constant 0 : i32
    %c0_i32_0 = arith.constant 0 : i32
    return %c0_i32, %arg0 : i32, i32
  }
}

</mosaic_0001>

<llo_original>
// kernel: tpu_custom_call.1
$region0: #{tpu_custom_call.1}
  #allocation0 [shape = 'u32[]', space=smem, size = 0x4, offset = 0x4, fixed_abs, tag = 'smem constant byte address 0x4 - core index']
  #allocation1 [shape = 'u32[144,128]{1,0:T(1,128)}', space=vmem, size = 0x12000, scoped, tag = 'internal scratch']
  #allocation2 [shape = 'f32[1]{0:T(128)S(6)}', space=smem, size = 0x200, scoped, tag = 'scoped memory for tpu_custom_call.1']
  %s0 = inlined_call_operand.vmem [shape: f32[8,1024], index: 0, kind: input, shape index: {}]
  %s1 = inlined_call_operand.vmem [shape: f32[256,8], index: 1, kind: input, shape index: {}]
  %s2 = inlined_call_operand.vmem [shape: f32[256,1], index: 2, kind: input, shape index: {}]
  %s3 = inlined_call_operand.vmem [shape: f32[256,1], index: 3, kind: input, shape index: {}]
  %s4 = inlined_call_operand.<no memory space> [shape: f32[1], index: 4, kind: input, shape index: {}]
  %s5 = inlined_call_operand.hbm [shape: f32[1,1024], index: 5, kind: output, shape index: {}]
  %s6 = sld [smem:[#allocation0]]
  $region53: #{tpu_custom_call.1} parent=0
    _
  %s8 = ssub.s32 1, %s6
  %s9 = scalar_select 0, %s8, %s6
  %10 = sst [smem:[#allocation2]] %s4
  $region1: #{tpu_custom_call.1} parent=0
    #allocation3 [shape = 'u8[4096]{0}', space=vmem, size = 0x1000, scoped, tag = 'output window, operand 0']
    #allocation4 [shape = 's32[2]{0}', space=sflag, size = 0x8, scoped, tag = 'scoped memory for tpu_custom_call.1']
    %11 = vsyncpa [#allocation4], 0
    %s12 = scalar_lea.sflag [#allocation4], 1
    %13 = vsyncpa %s12, 0
    loop: start=0, step=1, limit=4
    $region2: #{tpu_custom_call.1} parent=1 // loop_pre_header
      _
    $region3: #{tpu_custom_call.1} parent=1 // loop_header
      %s15 = sphi 0, %s19
      %p16 = scmp.ge.s32.totalorder %s15, 4
      %s25 = sphi 0, %s27
      %s28 = sphi 0, %s25
      %s29 = sphi 0, %s28
      %s45 = sphi 0, %s29
      %s49 = sphi 0, %s49
      %s51 = sphi 0, %s49
      %s52 = sphi 0, %s51
      %s66 = sphi 0, %s52
      %s70 = sphi 0, %s70
      %s72 = sphi 0, %s70
      %s73 = sphi 0, %s72
      %s87 = sphi 0, %s73
      %s91 = sphi 0, %s91
      %s93 = sphi 0, %s91
      %s94 = sphi 0, %s93
      %s108 = sphi 0, %s94
      %s112 = sphi 0, %s112
      %s114 = sphi 0, %s112
      %s115 = sphi 0, %s114
      %s129 = sphi 0, %s115
      %s135 = sphi 0, %s137
      %s138 = sphi 0, %s135
      %s139 = sphi 0, %s138
      %s155 = sphi 0, %s139
    $region4: #{tpu_custom_call.1} parent=1 // loop_header_branch
      %18 = sbr.rel (%p16) target = $region8
    $region5: #{tpu_custom_call.1} parent=1 // loop_body
      %s20 = ssub.s32 %s15, 1
      %s21 = ssub.s32 %s15, 2
      %s22 = sadd.s32 %s15, 1
      %s23 = ssub.s32 %s15, %s22
      %p24 = scmp.eq.s32.totalorder %s23, 0
      %s26 = sadd.s32 %s25, 1
      %s27 = scalar_select %p24, %s25, %s26
      %p30 = pneg %p24
      %p31 = scmp.eq.s32.totalorder %s15, 1
      %p32 = por %p30, %p31
      %p33 = scmp.ne.s32.totalorder %s25, %s28
      %p34 = scmp.eq.s32.totalorder %s15, 0
      %p35 = por %p33, %p34
      %p36 = scmp.ne.s32.totalorder %s25, %s28
      %p37 = scmp.eq.s32.totalorder %s20, 1
      %p38 = por %p36, %p37
      %p39 = scmp.ne.s32.totalorder %s28, %s29
      %p40 = scmp.eq.s32.totalorder %s20, 0
      %p41 = por %p39, %p40
      %p42 = scmp.ne.s32.totalorder %s28, %s29
      %p43 = scmp.eq.s32.totalorder %s21, 1
      %p44 = por %p42, %p43
      %p46 = scmp.ne.s32.totalorder %s29, %s45
      %p47 = scmp.eq.s32.totalorder %s21, 0
      %p48 = por %p46, %p47
      %s50 = sadd.s32 %s49, 1
      %p53 = scmp.eq.s32.totalorder %s15, 1
      %p54 = scmp.ne.s32.totalorder %s49, %s51
      %p55 = scmp.eq.s32.totalorder %s15, 0
      %p56 = por %p54, %p55
      %p57 = scmp.ne.s32.totalorder %s49, %s51
      %p58 = scmp.eq.s32.totalorder %s20, 1
      %p59 = por %p57, %p58
      %p60 = scmp.ne.s32.totalorder %s51, %s52
      %p61 = scmp.eq.s32.totalorder %s20, 0
      %p62 = por %p60, %p61
      %p63 = scmp.ne.s32.totalorder %s51, %s52
      %p64 = scmp.eq.s32.totalorder %s21, 1
      %p65 = por %p63, %p64
      %p67 = scmp.ne.s32.totalorder %s52, %s66
      %p68 = scmp.eq.s32.totalorder %s21, 0
      %p69 = por %p67, %p68
      %s71 = sadd.s32 %s70, 1
      %p74 = scmp.eq.s32.totalorder %s15, 1
      %p75 = scmp.ne.s32.totalorder %s70, %s72
      %p76 = scmp.eq.s32.totalorder %s15, 0
      %p77 = por %p75, %p76
      %p78 = scmp.ne.s32.totalorder %s70, %s72
      %p79 = scmp.eq.s32.totalorder %s20, 1
      %p80 = por %p78, %p79
      %p81 = scmp.ne.s32.totalorder %s72, %s73
      %p82 = scmp.eq.s32.totalorder %s20, 0
      %p83 = por %p81, %p82
      %p84 = scmp.ne.s32.totalorder %s72, %s73
      %p85 = scmp.eq.s32.totalorder %s21, 1
      %p86 = por %p84, %p85
      %p88 = scmp.ne.s32.totalorder %s73, %s87
      %p89 = scmp.eq.s32.totalorder %s21, 0
      %p90 = por %p88, %p89
      %s92 = sadd.s32 %s91, 1
      %p95 = scmp.eq.s32.totalorder %s15, 1
      %p96 = scmp.ne.s32.totalorder %s91, %s93
      %p97 = scmp.eq.s32.totalorder %s15, 0
      %p98 = por %p96, %p97
      %p99 = scmp.ne.s32.totalorder %s91, %s93
      %p100 = scmp.eq.s32.totalorder %s20, 1
      %p101 = por %p99, %p100
      %p102 = scmp.ne.s32.totalorder %s93, %s94
      %p103 = scmp.eq.s32.totalorder %s20, 0
      %p104 = por %p102, %p103
      %p105 = scmp.ne.s32.totalorder %s93, %s94
      %p106 = scmp.eq.s32.totalorder %s21, 1
      %p107 = por %p105, %p106
      %p109 = scmp.ne.s32.totalorder %s94, %s108
      %p110 = scmp.eq.s32.totalorder %s21, 0
      %p111 = por %p109, %p110
      %s113 = sadd.s32 %s112, 1
      %p116 = scmp.eq.s32.totalorder %s15, 1
      %p117 = scmp.ne.s32.totalorder %s112, %s114
      %p118 = scmp.eq.s32.totalorder %s15, 0
      %p119 = por %p117, %p118
      %p120 = scmp.ne.s32.totalorder %s112, %s114
      %p121 = scmp.eq.s32.totalorder %s20, 1
      %p122 = por %p120, %p121
      %p123 = scmp.ne.s32.totalorder %s114, %s115
      %p124 = scmp.eq.s32.totalorder %s20, 0
      %p125 = por %p123, %p124
      %p126 = scmp.ne.s32.totalorder %s114, %s115
      %p127 = scmp.eq.s32.totalorder %s21, 1
      %p128 = por %p126, %p127
      %p130 = scmp.ne.s32.totalorder %s115, %s129
      %p131 = scmp.eq.s32.totalorder %s21, 0
      %p132 = por %p130, %p131
      %s133 = ssub.s32 %s15, %s22
      %p134 = scmp.eq.s32.totalorder %s133, 0
      %s136 = sadd.s32 %s135, 1
      %s137 = scalar_select %p134, %s135, %s136
      %p140 = pneg %p134
      %p141 = scmp.eq.s32.totalorder %s15, 1
      %p142 = por %p140, %p141
      %p143 = scmp.ne.s32.totalorder %s135, %s138
      %p144 = scmp.eq.s32.totalorder %s15, 0
      %p145 = por %p143, %p144
      %p146 = scmp.ne.s32.totalorder %s135, %s138
      %p147 = scmp.eq.s32.totalorder %s20, 1
      %p148 = por %p146, %p147
      %p149 = scmp.ne.s32.totalorder %s138, %s139
      %p150 = scmp.eq.s32.totalorder %s20, 0
      %p151 = por %p149, %p150
      %p152 = scmp.ne.s32.totalorder %s138, %s139
      %p153 = scmp.eq.s32.totalorder %s21, 1
      %p154 = por %p152, %p153
      %p156 = scmp.ne.s32.totalorder %s139, %s155
      %p157 = scmp.eq.s32.totalorder %s21, 0
      %p158 = por %p156, %p157
      %p159 = scmp.le.s32.totalorder 1, %s15
      %p160 = scmp.lt.s32.totalorder %s15, 3
      %p161 = pnand %p159, %p160
      %p162 = pneg %p161
      // Predicated region
      $region9: #{tpu_custom_call.1} parent=5 // pred_check
        _
      $region10: #{tpu_custom_call.1} parent=5 // pred_check_branch
        %164 = sbr.rel (%p161) target = $region12
      $region11: #{tpu_custom_call.1} parent=5 // pred_region
        %s165 = ssub.s32 %s15, 1
        // Predicated region
        $region13: #{tpu_custom_call.1} parent=11 // pred_check
          %p166 = pneg %p62
        $region14: #{tpu_custom_call.1} parent=11 // pred_check_branch
          %168 = sbr.rel (%p166) target = $region16
        $region15: #{tpu_custom_call.1} parent=11 // pred_region
          _
        $region16: #{tpu_custom_call.1} parent=11 // pred_fallthru
          _
        // Predicated region
        $region17: #{tpu_custom_call.1} parent=11 // pred_check
          %p169 = pneg %p83
        $region18: #{tpu_custom_call.1} parent=11 // pred_check_branch
          %171 = sbr.rel (%p169) target = $region20
        $region19: #{tpu_custom_call.1} parent=11 // pred_region
          _
        $region20: #{tpu_custom_call.1} parent=11 // pred_fallthru
          _
        // Predicated region
        $region21: #{tpu_custom_call.1} parent=11 // pred_check
          %p172 = pneg %p104
        $region22: #{tpu_custom_call.1} parent=11 // pred_check_branch
          %174 = sbr.rel (%p172) target = $region24
        $region23: #{tpu_custom_call.1} parent=11 // pred_region
          _
        $region24: #{tpu_custom_call.1} parent=11 // pred_fallthru
          _
        // Predicated region
        $region25: #{tpu_custom_call.1} parent=11 // pred_check
          %p175 = pneg %p125
        $region26: #{tpu_custom_call.1} parent=11 // pred_check_branch
          %177 = sbr.rel (%p175) target = $region28
        $region27: #{tpu_custom_call.1} parent=11 // pred_region
          _
        $region28: #{tpu_custom_call.1} parent=11 // pred_fallthru
          _
      $region12: #{tpu_custom_call.1} parent=5 // pred_fallthru
        _
      %p178 = scmp.lt.s32.totalorder %s15, 2
      // Predicated region
      $region29: #{tpu_custom_call.1} parent=5 // pred_check
        %p179 = pneg %p178
      $region30: #{tpu_custom_call.1} parent=5 // pred_check_branch
        %181 = sbr.rel (%p179) target = $region32
      $region31: #{tpu_custom_call.1} parent=5 // pred_region
        // Predicated region
        $region33: #{tpu_custom_call.1} parent=31 // pred_check
          %p182 = pneg %p35
        $region34: #{tpu_custom_call.1} parent=31 // pred_check_branch
          %184 = sbr.rel (%p182) target = $region36
        $region35: #{tpu_custom_call.1} parent=31 // pred_region
          %s185 = smul.u32 4, %s15
          %p186 = scmp.lt.s32.totalorder %s185, 7
          %s187 = scalar_select %p186, %s185, 7
          %s188 = smul.addr %s187, 8
          %s189 = scalar_lea.vmem %s0, %s188
          %s190 = smul.u32 4, %s15
        $region36: #{tpu_custom_call.1} parent=31 // pred_fallthru
          _
      $region32: #{tpu_custom_call.1} parent=5 // pred_fallthru
        _
      %p191 = scmp.le.s32.totalorder 1, %s15
      %p192 = scmp.lt.s32.totalorder %s15, 3
      %p193 = pnand %p191, %p192
      %p194 = pneg %p193
      // Predicated region
      $region37: #{tpu_custom_call.1} parent=5 // pred_check
        _
      $region38: #{tpu_custom_call.1} parent=5 // pred_check_branch
        %196 = sbr.rel (%p193) target = $region40
      $region39: #{tpu_custom_call.1} parent=5 // pred_region
        %s197 = ssub.s32 %s15, 1
        %s198 = smul.u32 4, %s20
        %p199 = scmp.lt.s32.totalorder %s198, 7
        %s200 = scalar_select %p199, %s198, 7
        %s201 = smul.addr %s200, 8
        %s202 = scalar_lea.vmem %s0, %s201
        %p203 = pneg %p41
        %p204 = pneg %p38
        %p205 = pneg %p62
        %p206 = pneg %p59
        %p207 = pneg %p83
        %p208 = pneg %p80
        %p209 = pneg %p104
        %p210 = pneg %p101
        %p211 = pneg %p125
        %p212 = pneg %p122
        %p213 = pneg %p151
        %p214 = pneg %p148
        %s215 = sand.u32 %s138, 1
        %s216 = scalar_lea.sflag [#allocation4], %s215
        %s217 = sand.u32 %s138, 1
        %s218 = smul.addr %s217, 4
        %s219 = scalar_lea.vmem [#allocation3], %s218
        %s220 = smul.u32 4, %s20
        %p221 = scmp.lt.s32.totalorder %s220, 7
        %s222 = scalar_select %p221, %s220, 7
        %s223 = smul.addr %s222, 8
        %s224 = scalar_lea.vmem %s0, %s223
        %s225 = smul.u32 4, %s20
        %s226 = smul.u32 4, %s20
        %v227 = vld [vmem:[%s1] sm:$0xff]
        %v228 = vld [vmem:[%s1 + $0x8] sm:$0xff]
        %v229 = vld [vmem:[%s1 + $0x10] sm:$0xff]
        %v230 = vld [vmem:[%s1 + $0x18] sm:$0xff]
        %v231 = vld [vmem:[%s1 + $0x20] sm:$0xff]
        %v232 = vld [vmem:[%s1 + $0x28] sm:$0xff]
        %v233 = vld [vmem:[%s1 + $0x30] sm:$0xff]
        %v234 = vld [vmem:[%s1 + $0x38] sm:$0xff]
        %v235 = vld [vmem:[%s1 + $0x40] sm:$0xff]
        %v236 = vld [vmem:[%s1 + $0x48] sm:$0xff]
        %v237 = vld [vmem:[%s1 + $0x50] sm:$0xff]
        %v238 = vld [vmem:[%s1 + $0x58] sm:$0xff]
        %v239 = vld [vmem:[%s1 + $0x60] sm:$0xff]
        %v240 = vld [vmem:[%s1 + $0x68] sm:$0xff]
        %v241 = vld [vmem:[%s1 + $0x70] sm:$0xff]
        %v242 = vld [vmem:[%s1 + $0x78] sm:$0xff]
        %v243 = vld [vmem:[%s1 + $0x80] sm:$0xff]
        %v244 = vld [vmem:[%s1 + $0x88] sm:$0xff]
        %v245 = vld [vmem:[%s1 + $0x90] sm:$0xff]
        %v246 = vld [vmem:[%s1 + $0x98] sm:$0xff]
        %v247 = vld [vmem:[%s1 + $0xa0] sm:$0xff]
        %v248 = vld [vmem:[%s1 + $0xa8] sm:$0xff]
        %v249 = vld [vmem:[%s1 + $0xb0] sm:$0xff]
        %v250 = vld [vmem:[%s1 + $0xb8] sm:$0xff]
        %v251 = vld [vmem:[%s1 + $0xc0] sm:$0xff]
        %v252 = vld [vmem:[%s1 + $0xc8] sm:$0xff]
        %v253 = vld [vmem:[%s1 + $0xd0] sm:$0xff]
        %v254 = vld [vmem:[%s1 + $0xd8] sm:$0xff]
        %v255 = vld [vmem:[%s1 + $0xe0] sm:$0xff]
        %v256 = vld [vmem:[%s1 + $0xe8] sm:$0xff]
        %v257 = vld [vmem:[%s1 + $0xf0] sm:$0xff]
        %v258 = vld [vmem:[%s1 + $0xf8] sm:$0xff]
        %v259 = vld [vmem:[%s224] sm:$0xff]
        %v260 = vld [vmem:[%s224 + $0x8] sm:$0xff]
        %v261 = vld [vmem:[%s224 + $0x10] sm:$0xff]
        %v262 = vld [vmem:[%s224 + $0x18] sm:$0xff]
        %v263 = vld [vmem:[%s2] sm:$0xff]
        %v264 = vld [vmem:[%s2 + $0x8] sm:$0xff]
        %v265 = vld [vmem:[%s2 + $0x10] sm:$0xff]
        %v266 = vld [vmem:[%s2 + $0x18] sm:$0xff]
        %v267 = vld [vmem:[%s2 + $0x20] sm:$0xff]
        %v268 = vld [vmem:[%s2 + $0x28] sm:$0xff]
        %v269 = vld [vmem:[%s2 + $0x30] sm:$0xff]
        %v270 = vld [vmem:[%s2 + $0x38] sm:$0xff]
        %v271 = vld [vmem:[%s2 + $0x40] sm:$0xff]
        %v272 = vld [vmem:[%s2 + $0x48] sm:$0xff]
        %v273 = vld [vmem:[%s2 + $0x50] sm:$0xff]
        %v274 = vld [vmem:[%s2 + $0x58] sm:$0xff]
        %v275 = vld [vmem:[%s2 + $0x60] sm:$0xff]
        %v276 = vld [vmem:[%s2 + $0x68] sm:$0xff]
        %v277 = vld [vmem:[%s2 + $0x70] sm:$0xff]
        %v278 = vld [vmem:[%s2 + $0x78] sm:$0xff]
        %v279 = vld [vmem:[%s2 + $0x80] sm:$0xff]
        %v280 = vld [vmem:[%s2 + $0x88] sm:$0xff]
        %v281 = vld [vmem:[%s2 + $0x90] sm:$0xff]
        %v282 = vld [vmem:[%s2 + $0x98] sm:$0xff]
        %v283 = vld [vmem:[%s2 + $0xa0] sm:$0xff]
        %v284 = vld [vmem:[%s2 + $0xa8] sm:$0xff]
        %v285 = vld [vmem:[%s2 + $0xb0] sm:$0xff]
        %v286 = vld [vmem:[%s2 + $0xb8] sm:$0xff]
        %v287 = vld [vmem:[%s2 + $0xc0] sm:$0xff]
        %v288 = vld [vmem:[%s2 + $0xc8] sm:$0xff]
        %v289 = vld [vmem:[%s2 + $0xd0] sm:$0xff]
        %v290 = vld [vmem:[%s2 + $0xd8] sm:$0xff]
        %v291 = vld [vmem:[%s2 + $0xe0] sm:$0xff]
        %v292 = vld [vmem:[%s2 + $0xe8] sm:$0xff]
        %v293 = vld [vmem:[%s2 + $0xf0] sm:$0xff]
        %v294 = vld [vmem:[%s2 + $0xf8] sm:$0xff]
        %296 = vset.pattern.permute.xlu0 0
        %297 = vperm.xlu0 %296, %v263
        %v298 = vpop.permute.xlu0 %297
        %301 = vset.pattern.permute.xlu0 0
        %302 = vperm.xlu0 %301, %v264
        %v303 = vpop.permute.xlu0 %302
        %306 = vset.pattern.permute.xlu0 0
        %307 = vperm.xlu0 %306, %v265
        %v308 = vpop.permute.xlu0 %307
        %311 = vset.pattern.permute.xlu0 0
        %312 = vperm.xlu0 %311, %v266
        %v313 = vpop.permute.xlu0 %312
        %316 = vset.pattern.permute.xlu0 0
        %317 = vperm.xlu0 %316, %v267
        %v318 = vpop.permute.xlu0 %317
        %321 = vset.pattern.permute.xlu0 0
        %322 = vperm.xlu0 %321, %v268
        %v323 = vpop.permute.xlu0 %322
        %326 = vset.pattern.permute.xlu0 0
        %327 = vperm.xlu0 %326, %v269
        %v328 = vpop.permute.xlu0 %327
        %331 = vset.pattern.permute.xlu0 0
        %332 = vperm.xlu0 %331, %v270
        %v333 = vpop.permute.xlu0 %332
        %336 = vset.pattern.permute.xlu0 0
        %337 = vperm.xlu0 %336, %v271
        %v338 = vpop.permute.xlu0 %337
        %341 = vset.pattern.permute.xlu0 0
        %342 = vperm.xlu0 %341, %v272
        %v343 = vpop.permute.xlu0 %342
        %346 = vset.pattern.permute.xlu0 0
        %347 = vperm.xlu0 %346, %v273
        %v348 = vpop.permute.xlu0 %347
        %351 = vset.pattern.permute.xlu0 0
        %352 = vperm.xlu0 %351, %v274
        %v353 = vpop.permute.xlu0 %352
        %356 = vset.pattern.permute.xlu0 0
        %357 = vperm.xlu0 %356, %v275
        %v358 = vpop.permute.xlu0 %357
        %361 = vset.pattern.permute.xlu0 0
        %362 = vperm.xlu0 %361, %v276
        %v363 = vpop.permute.xlu0 %362
        %366 = vset.pattern.permute.xlu0 0
        %367 = vperm.xlu0 %366, %v277
        %v368 = vpop.permute.xlu0 %367
        %371 = vset.pattern.permute.xlu0 0
        %372 = vperm.xlu0 %371, %v278
        %v373 = vpop.permute.xlu0 %372
        %376 = vset.pattern.permute.xlu0 0
        %377 = vperm.xlu0 %376, %v279
        %v378 = vpop.permute.xlu0 %377
        %381 = vset.pattern.permute.xlu0 0
        %382 = vperm.xlu0 %381, %v280
        %v383 = vpop.permute.xlu0 %382
        %386 = vset.pattern.permute.xlu0 0
        %387 = vperm.xlu0 %386, %v281
        %v388 = vpop.permute.xlu0 %387
        %391 = vset.pattern.permute.xlu0 0
        %392 = vperm.xlu0 %391, %v282
        %v393 = vpop.permute.xlu0 %392
        %396 = vset.pattern.permute.xlu0 0
        %397 = vperm.xlu0 %396, %v283
        %v398 = vpop.permute.xlu0 %397
        %401 = vset.pattern.permute.xlu0 0
        %402 = vperm.xlu0 %401, %v284
        %v403 = vpop.permute.xlu0 %402
        %406 = vset.pattern.permute.xlu0 0
        %407 = vperm.xlu0 %406, %v285
        %v408 = vpop.permute.xlu0 %407
        %411 = vset.pattern.permute.xlu0 0
        %412 = vperm.xlu0 %411, %v286
        %v413 = vpop.permute.xlu0 %412
        %416 = vset.pattern.permute.xlu0 0
        %417 = vperm.xlu0 %416, %v287
        %v418 = vpop.permute.xlu0 %417
        %421 = vset.pattern.permute.xlu0 0
        %422 = vperm.xlu0 %421, %v288
        %v423 = vpop.permute.xlu0 %422
        %426 = vset.pattern.permute.xlu0 0
        %427 = vperm.xlu0 %426, %v289
        %v428 = vpop.permute.xlu0 %427
        %431 = vset.pattern.permute.xlu0 0
        %432 = vperm.xlu0 %431, %v290
        %v433 = vpop.permute.xlu0 %432
        %436 = vset.pattern.permute.xlu0 0
        %437 = vperm.xlu0 %436, %v291
        %v438 = vpop.permute.xlu0 %437
        %441 = vset.pattern.permute.xlu0 0
        %442 = vperm.xlu0 %441, %v292
        %v443 = vpop.permute.xlu0 %442
        %446 = vset.pattern.permute.xlu0 0
        %447 = vperm.xlu0 %446, %v293
        %v448 = vpop.permute.xlu0 %447
        %451 = vset.pattern.permute.xlu0 0
        %452 = vperm.xlu0 %451, %v294
        %v453 = vpop.permute.xlu0 %452
        %vm455 = vcmask 64512
        %v457 = vsel %vm455, %v227, 0
        %v460 = vsel %vm455, %v228, 0
        %v463 = vsel %vm455, %v229, 0
        %v466 = vsel %vm455, %v230, 0
        %v469 = vsel %vm455, %v231, 0
        %v472 = vsel %vm455, %v232, 0
        %v475 = vsel %vm455, %v233, 0
        %v478 = vsel %vm455, %v234, 0
        %v481 = vsel %vm455, %v235, 0
        %v484 = vsel %vm455, %v236, 0
        %v487 = vsel %vm455, %v237, 0
        %v490 = vsel %vm455, %v238, 0
        %v493 = vsel %vm455, %v239, 0
        %v496 = vsel %vm455, %v240, 0
        %v499 = vsel %vm455, %v241, 0
        %v502 = vsel %vm455, %v242, 0
        %v505 = vsel %vm455, %v243, 0
        %v508 = vsel %vm455, %v244, 0
        %v511 = vsel %vm455, %v245, 0
        %v514 = vsel %vm455, %v246, 0
        %v517 = vsel %vm455, %v247, 0
        %v520 = vsel %vm455, %v248, 0
        %v523 = vsel %vm455, %v249, 0
        %v526 = vsel %vm455, %v250, 0
        %v529 = vsel %vm455, %v251, 0
        %v532 = vsel %vm455, %v252, 0
        %v535 = vsel %vm455, %v253, 0
        %v538 = vsel %vm455, %v254, 0
        %v541 = vsel %vm455, %v255, 0
        %v544 = vsel %vm455, %v256, 0
        %v547 = vsel %vm455, %v257, 0
        %v550 = vsel %vm455, %v258, 0
        %552 = vmatprep.subr.mxu0 0.0
        %553 = vmatpush1.msra.mxu0 0.0
        %554 = vmatprep.subr.mxu0 0.0
        %555 = vmatpush1.msra.mxu0 0.0
        %556 = vmatprep.subr.mxu0 0.0
        %557 = vmatpush1.msra.mxu0 0.0
        %558 = vmatprep.subr.mxu0 0.0
        %559 = vmatpush1.msra.mxu0 0.0
        %560 = vmatprep.subr.mxu0 0.0
        %561 = vmatpush1.msra.mxu0 0.0
        %562 = vmatprep.subr.mxu0 0.0
        %563 = vmatpush1.msra.mxu0 0.0
        %564 = vmatprep.subr.mxu0 0.0
        %565 = vmatpush1.msra.mxu0 0.0
        %566 = vmatprep.subr.mxu0 0.0
        %567 = vmatpush1.msra.mxu0 0.0
        %568 = vmatprep.subr.mxu0 0.0
        %569 = vmatpush1.msra.mxu0 0.0
        %570 = vmatprep.subr.mxu0 0.0
        %571 = vmatpush1.msra.mxu0 0.0
        %572 = vmatprep.subr.mxu0 0.0
        %573 = vmatpush1.msra.mxu0 0.0
        %574 = vmatprep.subr.mxu0 0.0
        %575 = vmatpush1.msra.mxu0 0.0
        %576 = vmatprep.subr.mxu0 0.0
        %577 = vmatpush1.msra.mxu0 0.0
        %578 = vmatprep.subr.mxu0 0.0
        %579 = vmatpush1.msra.mxu0 0.0
        %580 = vmatprep.subr.mxu0 0.0
        %581 = vmatpush1.msra.mxu0 0.0
        %582 = vmatprep.subr.mxu0 %v260
        %583 = vmatpush1.msra.mxu0 %v259
        %584 = vmatprep.subr.mxu0 0.0
        %585 = vmatpush2.msra.mxu0 0.0
        %586 = vmatprep.subr.mxu0 0.0
        %587 = vmatpush2.msra.mxu0 0.0
        %588 = vmatprep.subr.mxu0 0.0
        %589 = vmatpush2.msra.mxu0 0.0
        %590 = vmatprep.subr.mxu0 0.0
        %591 = vmatpush2.msra.mxu0 0.0
        %592 = vmatprep.subr.mxu0 0.0
        %593 = vmatpush2.msra.mxu0 0.0
        %594 = vmatprep.subr.mxu0 0.0
        %595 = vmatpush2.msra.mxu0 0.0
        %596 = vmatprep.subr.mxu0 0.0
        %597 = vmatpush2.msra.mxu0 0.0
        %598 = vmatprep.subr.mxu0 0.0
        %599 = vmatpush2.msra.mxu0 0.0
        %600 = vmatprep.subr.mxu0 0.0
        %601 = vmatpush2.msra.mxu0 0.0
        %602 = vmatprep.subr.mxu0 0.0
        %603 = vmatpush2.msra.mxu0 0.0
        %604 = vmatprep.subr.mxu0 0.0
        %605 = vmatpush2.msra.mxu0 0.0
        %606 = vmatprep.subr.mxu0 0.0
        %607 = vmatpush2.msra.mxu0 0.0
        %608 = vmatprep.subr.mxu0 0.0
        %609 = vmatpush2.msra.mxu0 0.0
        %610 = vmatprep.subr.mxu0 0.0
        %611 = vmatpush2.msra.mxu0 0.0
        %612 = vmatprep.subr.mxu0 0.0
        %613 = vmatpush2.msra.mxu0 0.0
        %614 = vmatprep.subr.mxu0 0.0
        %615 = vmatpush2.msra.mxu0 0.0
        %616 = vmatprep.mubr.f32.mxu0 0.0
        %617 = vmatmul.mubr.f32.gmra.mxu0 %v457
        %v618 = vpop.f32.mrf.mxu0
        %v619 = vadd.f32 %v298, %v618
        %v620 = vpop.f32.mrf.mxu0
        %v621 = vadd.f32 %v298, %v620
        %622 = vmatprep.mubr.f32.mxu0 0.0
        %623 = vmatmul.mubr.f32.gmra.mxu0 %v460
        %v624 = vpop.f32.mrf.mxu0
        %v625 = vadd.f32 %v303, %v624
        %v626 = vpop.f32.mrf.mxu0
        %v627 = vadd.f32 %v303, %v626
        %628 = vmatprep.mubr.f32.mxu0 0.0
        %629 = vmatmul.mubr.f32.gmra.mxu0 %v463
        %v630 = vpop.f32.mrf.mxu0
        %v631 = vadd.f32 %v308, %v630
        %v632 = vpop.f32.mrf.mxu0
        %v633 = vadd.f32 %v308, %v632
        %634 = vmatprep.mubr.f32.mxu0 0.0
        %635 = vmatmul.mubr.f32.gmra.mxu0 %v466
        %v636 = vpop.f32.mrf.mxu0
        %v637 = vadd.f32 %v313, %v636
        %v638 = vpop.f32.mrf.mxu0
        %v639 = vadd.f32 %v313, %v638
        %640 = vmatprep.mubr.f32.mxu0 0.0
        %641 = vmatmul.mubr.f32.gmra.mxu0 %v469
        %v642 = vpop.f32.mrf.mxu0
        %v643 = vadd.f32 %v318, %v642
        %v644 = vpop.f32.mrf.mxu0
        %v645 = vadd.f32 %v318, %v644
        %646 = vmatprep.mubr.f32.mxu0 0.0
        %647 = vmatmul.mubr.f32.gmra.mxu0 %v472
        %v648 = vpop.f32.mrf.mxu0
        %v649 = vadd.f32 %v323, %v648
        %v650 = vpop.f32.mrf.mxu0
        %v651 = vadd.f32 %v323, %v650
        %652 = vmatprep.mubr.f32.mxu0 0.0
        %653 = vmatmul.mubr.f32.gmra.mxu0 %v475
        %v654 = vpop.f32.mrf.mxu0
        %v655 = vadd.f32 %v328, %v654
        %v656 = vpop.f32.mrf.mxu0
        %v657 = vadd.f32 %v328, %v656
        %658 = vmatprep.mubr.f32.mxu0 0.0
        %659 = vmatmul.mubr.f32.gmra.mxu0 %v478
        %v660 = vpop.f32.mrf.mxu0
        %v661 = vadd.f32 %v333, %v660
        %v662 = vpop.f32.mrf.mxu0
        %v663 = vadd.f32 %v333, %v662
        %664 = vmatprep.mubr.f32.mxu0 0.0
        %665 = vmatmul.mubr.f32.gmra.mxu0 %v481
        %v666 = vpop.f32.mrf.mxu0
        %v667 = vadd.f32 %v338, %v666
        %v668 = vpop.f32.mrf.mxu0
        %v669 = vadd.f32 %v338, %v668
        %670 = vmatprep.mubr.f32.mxu0 0.0
        %671 = vmatmul.mubr.f32.gmra.mxu0 %v484
        %v672 = vpop.f32.mrf.mxu0
        %v673 = vadd.f32 %v343, %v672
        %v674 = vpop.f32.mrf.mxu0
        %v675 = vadd.f32 %v343, %v674
        %676 = vmatprep.mubr.f32.mxu0 0.0
        %677 = vmatmul.mubr.f32.gmra.mxu0 %v487
        %v678 = vpop.f32.mrf.mxu0
        %v679 = vadd.f32 %v348, %v678
        %v680 = vpop.f32.mrf.mxu0
        %v681 = vadd.f32 %v348, %v680
        %682 = vmatprep.mubr.f32.mxu0 0.0
        %683 = vmatmul.mubr.f32.gmra.mxu0 %v490
        %v684 = vpop.f32.mrf.mxu0
        %v685 = vadd.f32 %v353, %v684
        %v686 = vpop.f32.mrf.mxu0
        %v687 = vadd.f32 %v353, %v686
        %688 = vmatprep.mubr.f32.mxu0 0.0
        %689 = vmatmul.mubr.f32.gmra.mxu0 %v493
        %v690 = vpop.f32.mrf.mxu0
        %v691 = vadd.f32 %v358, %v690
        %v692 = vpop.f32.mrf.mxu0
        %v693 = vadd.f32 %v358, %v692
        %694 = vmatprep.mubr.f32.mxu0 0.0
        %695 = vmatmul.mubr.f32.gmra.mxu0 %v496
        %v696 = vpop.f32.mrf.mxu0
        %v697 = vadd.f32 %v363, %v696
        %v698 = vpop.f32.mrf.mxu0
        %v699 = vadd.f32 %v363, %v698
        %700 = vmatprep.mubr.f32.mxu0 0.0
        %701 = vmatmul.mubr.f32.gmra.mxu0 %v499
        %v702 = vpop.f32.mrf.mxu0
        %v703 = vadd.f32 %v368, %v702
        %v704 = vpop.f32.mrf.mxu0
        %v705 = vadd.f32 %v368, %v704
        %706 = vmatprep.mubr.f32.mxu0 0.0
        %707 = vmatmul.mubr.f32.gmra.mxu0 %v502
        %v708 = vpop.f32.mrf.mxu0
        %v709 = vadd.f32 %v373, %v708
        %v710 = vpop.f32.mrf.mxu0
        %v711 = vadd.f32 %v373, %v710
        %712 = vmatprep.mubr.f32.mxu0 0.0
        %713 = vmatmul.mubr.f32.gmra.mxu0 %v505
        %v714 = vpop.f32.mrf.mxu0
        %v715 = vadd.f32 %v378, %v714
        %v716 = vpop.f32.mrf.mxu0
        %v717 = vadd.f32 %v378, %v716
        %718 = vmatprep.mubr.f32.mxu0 0.0
        %719 = vmatmul.mubr.f32.gmra.mxu0 %v508
        %v720 = vpop.f32.mrf.mxu0
        %v721 = vadd.f32 %v383, %v720
        %v722 = vpop.f32.mrf.mxu0
        %v723 = vadd.f32 %v383, %v722
        %724 = vmatprep.mubr.f32.mxu0 0.0
        %725 = vmatmul.mubr.f32.gmra.mxu0 %v511
        %v726 = vpop.f32.mrf.mxu0
        %v727 = vadd.f32 %v388, %v726
        %v728 = vpop.f32.mrf.mxu0
        %v729 = vadd.f32 %v388, %v728
        %730 = vmatprep.mubr.f32.mxu0 0.0
        %731 = vmatmul.mubr.f32.gmra.mxu0 %v514
        %v732 = vpop.f32.mrf.mxu0
        %v733 = vadd.f32 %v393, %v732
        %v734 = vpop.f32.mrf.mxu0
        %v735 = vadd.f32 %v393, %v734
        %736 = vmatprep.mubr.f32.mxu0 0.0
        %737 = vmatmul.mubr.f32.gmra.mxu0 %v517
        %v738 = vpop.f32.mrf.mxu0
        %v739 = vadd.f32 %v398, %v738
        %v740 = vpop.f32.mrf.mxu0
        %v741 = vadd.f32 %v398, %v740
        %742 = vmatprep.mubr.f32.mxu0 0.0
        %743 = vmatmul.mubr.f32.gmra.mxu0 %v520
        %v744 = vpop.f32.mrf.mxu0
        %v745 = vadd.f32 %v403, %v744
        %v746 = vpop.f32.mrf.mxu0
        %v747 = vadd.f32 %v403, %v746
        %748 = vmatprep.mubr.f32.mxu0 0.0
        %749 = vmatmul.mubr.f32.gmra.mxu0 %v523
        %v750 = vpop.f32.mrf.mxu0
        %v751 = vadd.f32 %v408, %v750
        %v752 = vpop.f32.mrf.mxu0
        %v753 = vadd.f32 %v408, %v752
        %754 = vmatprep.mubr.f32.mxu0 0.0
        %755 = vmatmul.mubr.f32.gmra.mxu0 %v526
        %v756 = vpop.f32.mrf.mxu0
        %v757 = vadd.f32 %v413, %v756
        %v758 = vpop.f32.mrf.mxu0
        %v759 = vadd.f32 %v413, %v758
        %760 = vmatprep.mubr.f32.mxu0 0.0
        %761 = vmatmul.mubr.f32.gmra.mxu0 %v529
        %v762 = vpop.f32.mrf.mxu0
        %v763 = vadd.f32 %v418, %v762
        %v764 = vpop.f32.mrf.mxu0
        %v765 = vadd.f32 %v418, %v764
        %766 = vmatprep.mubr.f32.mxu0 0.0
        %767 = vmatmul.mubr.f32.gmra.mxu0 %v532
        %v768 = vpop.f32.mrf.mxu0
        %v769 = vadd.f32 %v423, %v768
        %v770 = vpop.f32.mrf.mxu0
        %v771 = vadd.f32 %v423, %v770
        %772 = vmatprep.mubr.f32.mxu0 0.0
        %773 = vmatmul.mubr.f32.gmra.mxu0 %v535
        %v774 = vpop.f32.mrf.mxu0
        %v775 = vadd.f32 %v428, %v774
        %v776 = vpop.f32.mrf.mxu0
        %v777 = vadd.f32 %v428, %v776
        %778 = vmatprep.mubr.f32.mxu0 0.0
        %779 = vmatmul.mubr.f32.gmra.mxu0 %v538
        %v780 = vpop.f32.mrf.mxu0
        %v781 = vadd.f32 %v433, %v780
        %v782 = vpop.f32.mrf.mxu0
        %v783 = vadd.f32 %v433, %v782
        %784 = vmatprep.mubr.f32.mxu0 0.0
        %785 = vmatmul.mubr.f32.gmra.mxu0 %v541
        %v786 = vpop.f32.mrf.mxu0
        %v787 = vadd.f32 %v438, %v786
        %v788 = vpop.f32.mrf.mxu0
        %v789 = vadd.f32 %v438, %v788
        %790 = vmatprep.mubr.f32.mxu0 0.0
        %791 = vmatmul.mubr.f32.gmra.mxu0 %v544
        %v792 = vpop.f32.mrf.mxu0
        %v793 = vadd.f32 %v443, %v792
        %v794 = vpop.f32.mrf.mxu0
        %v795 = vadd.f32 %v443, %v794
        %796 = vmatprep.mubr.f32.mxu0 0.0
        %797 = vmatmul.mubr.f32.gmra.mxu0 %v547
        %v798 = vpop.f32.mrf.mxu0
        %v799 = vadd.f32 %v448, %v798
        %v800 = vpop.f32.mrf.mxu0
        %v801 = vadd.f32 %v448, %v800
        %802 = vmatprep.mubr.f32.mxu0 0.0
        %803 = vmatmul.mubr.f32.gmra.mxu0 %v550
        %v804 = vpop.f32.mrf.mxu0
        %v805 = vadd.f32 %v453, %v804
        %v806 = vpop.f32.mrf.mxu0
        %v807 = vadd.f32 %v453, %v806
        %808 = vdwg.mxu0
        %809 = vmatprep.subr.mxu0 0.0
        %810 = vmatpush1.msra.mxu0 0.0
        %811 = vmatprep.subr.mxu0 0.0
        %812 = vmatpush1.msra.mxu0 0.0
        %813 = vmatprep.subr.mxu0 0.0
        %814 = vmatpush1.msra.mxu0 0.0
        %815 = vmatprep.subr.mxu0 0.0
        %816 = vmatpush1.msra.mxu0 0.0
        %817 = vmatprep.subr.mxu0 0.0
        %818 = vmatpush1.msra.mxu0 0.0
        %819 = vmatprep.subr.mxu0 0.0
        %820 = vmatpush1.msra.mxu0 0.0
        %821 = vmatprep.subr.mxu0 0.0
        %822 = vmatpush1.msra.mxu0 0.0
        %823 = vmatprep.subr.mxu0 0.0
        %824 = vmatpush1.msra.mxu0 0.0
        %825 = vmatprep.subr.mxu0 0.0
        %826 = vmatpush1.msra.mxu0 0.0
        %827 = vmatprep.subr.mxu0 0.0
        %828 = vmatpush1.msra.mxu0 0.0
        %829 = vmatprep.subr.mxu0 0.0
        %830 = vmatpush1.msra.mxu0 0.0
        %831 = vmatprep.subr.mxu0 0.0
        %832 = vmatpush1.msra.mxu0 0.0
        %833 = vmatprep.subr.mxu0 0.0
        %834 = vmatpush1.msra.mxu0 0.0
        %835 = vmatprep.subr.mxu0 0.0
        %836 = vmatpush1.msra.mxu0 0.0
        %837 = vmatprep.subr.mxu0 0.0
        %838 = vmatpush1.msra.mxu0 0.0
        %839 = vmatprep.subr.mxu0 %v262
        %840 = vmatpush1.msra.mxu0 %v261
        %841 = vmatprep.subr.mxu0 0.0
        %842 = vmatpush2.msra.mxu0 0.0
        %843 = vmatprep.subr.mxu0 0.0
        %844 = vmatpush2.msra.mxu0 0.0
        %845 = vmatprep.subr.mxu0 0.0
        %846 = vmatpush2.msra.mxu0 0.0
        %847 = vmatprep.subr.mxu0 0.0
        %848 = vmatpush2.msra.mxu0 0.0
        %849 = vmatprep.subr.mxu0 0.0
        %850 = vmatpush2.msra.mxu0 0.0
        %851 = vmatprep.subr.mxu0 0.0
        %852 = vmatpush2.msra.mxu0 0.0
        %853 = vmatprep.subr.mxu0 0.0
        %854 = vmatpush2.msra.mxu0 0.0
        %855 = vmatprep.subr.mxu0 0.0
        %856 = vmatpush2.msra.mxu0 0.0
        %857 = vmatprep.subr.mxu0 0.0
        %858 = vmatpush2.msra.mxu0 0.0
        %859 = vmatprep.subr.mxu0 0.0
        %860 = vmatpush2.msra.mxu0 0.0
        %861 = vmatprep.subr.mxu0 0.0
        %862 = vmatpush2.msra.mxu0 0.0
        %863 = vmatprep.subr.mxu0 0.0
        %864 = vmatpush2.msra.mxu0 0.0
        %865 = vmatprep.subr.mxu0 0.0
        %866 = vmatpush2.msra.mxu0 0.0
        %867 = vmatprep.subr.mxu0 0.0
        %868 = vmatpush2.msra.mxu0 0.0
        %869 = vmatprep.subr.mxu0 0.0
        %870 = vmatpush2.msra.mxu0 0.0
        %871 = vmatprep.subr.mxu0 0.0
        %872 = vmatpush2.msra.mxu0 0.0
        %873 = vmatprep.mubr.f32.mxu0 0.0
        %874 = vmatmul.mubr.f32.gmra.mxu0 %v457
        %v875 = vpop.f32.mrf.mxu0
        %v876 = vadd.f32 %v298, %v875
        %v877 = vpop.f32.mrf.mxu0
        %v878 = vadd.f32 %v298, %v877
        %879 = vmatprep.mubr.f32.mxu0 0.0
        %880 = vmatmul.mubr.f32.gmra.mxu0 %v460
        %v881 = vpop.f32.mrf.mxu0
        %v882 = vadd.f32 %v303, %v881
        %v883 = vpop.f32.mrf.mxu0
        %v884 = vadd.f32 %v303, %v883
        %885 = vmatprep.mubr.f32.mxu0 0.0
        %886 = vmatmul.mubr.f32.gmra.mxu0 %v463
        %v887 = vpop.f32.mrf.mxu0
        %v888 = vadd.f32 %v308, %v887
        %v889 = vpop.f32.mrf.mxu0
        %v890 = vadd.f32 %v308, %v889
        %891 = vmatprep.mubr.f32.mxu0 0.0
        %892 = vmatmul.mubr.f32.gmra.mxu0 %v466
        %v893 = vpop.f32.mrf.mxu0
        %v894 = vadd.f32 %v313, %v893
        %v895 = vpop.f32.mrf.mxu0
        %v896 = vadd.f32 %v313, %v895
        %897 = vmatprep.mubr.f32.mxu0 0.0
        %898 = vmatmul.mubr.f32.gmra.mxu0 %v469
        %v899 = vpop.f32.mrf.mxu0
        %v900 = vadd.f32 %v318, %v899
        %v901 = vpop.f32.mrf.mxu0
        %v902 = vadd.f32 %v318, %v901
        %903 = vmatprep.mubr.f32.mxu0 0.0
        %904 = vmatmul.mubr.f32.gmra.mxu0 %v472
        %v905 = vpop.f32.mrf.mxu0
        %v906 = vadd.f32 %v323, %v905
        %v907 = vpop.f32.mrf.mxu0
        %v908 = vadd.f32 %v323, %v907
        %909 = vmatprep.mubr.f32.mxu0 0.0
        %910 = vmatmul.mubr.f32.gmra.mxu0 %v475
        %v911 = vpop.f32.mrf.mxu0
        %v912 = vadd.f32 %v328, %v911
        %v913 = vpop.f32.mrf.mxu0
        %v914 = vadd.f32 %v328, %v913
        %915 = vmatprep.mubr.f32.mxu0 0.0
        %916 = vmatmul.mubr.f32.gmra.mxu0 %v478
        %v917 = vpop.f32.mrf.mxu0
        %v918 = vadd.f32 %v333, %v917
        %v919 = vpop.f32.mrf.mxu0
        %v920 = vadd.f32 %v333, %v919
        %921 = vmatprep.mubr.f32.mxu0 0.0
        %922 = vmatmul.mubr.f32.gmra.mxu0 %v481
        %v923 = vpop.f32.mrf.mxu0
        %v924 = vadd.f32 %v338, %v923
        %v925 = vpop.f32.mrf.mxu0
        %v926 = vadd.f32 %v338, %v925
        %927 = vmatprep.mubr.f32.mxu0 0.0
        %928 = vmatmul.mubr.f32.gmra.mxu0 %v484
        %v929 = vpop.f32.mrf.mxu0
        %v930 = vadd.f32 %v343, %v929
        %v931 = vpop.f32.mrf.mxu0
        %v932 = vadd.f32 %v343, %v931
        %933 = vmatprep.mubr.f32.mxu0 0.0
        %934 = vmatmul.mubr.f32.gmra.mxu0 %v487
        %v935 = vpop.f32.mrf.mxu0
        %v936 = vadd.f32 %v348, %v935
        %v937 = vpop.f32.mrf.mxu0
        %v938 = vadd.f32 %v348, %v937
        %939 = vmatprep.mubr.f32.mxu0 0.0
        %940 = vmatmul.mubr.f32.gmra.mxu0 %v490
        %v941 = vpop.f32.mrf.mxu0
        %v942 = vadd.f32 %v353, %v941
        %v943 = vpop.f32.mrf.mxu0
        %v944 = vadd.f32 %v353, %v943
        %945 = vmatprep.mubr.f32.mxu0 0.0
        %946 = vmatmul.mubr.f32.gmra.mxu0 %v493
        %v947 = vpop.f32.mrf.mxu0
        %v948 = vadd.f32 %v358, %v947
        %v949 = vpop.f32.mrf.mxu0
        %v950 = vadd.f32 %v358, %v949
        %951 = vmatprep.mubr.f32.mxu0 0.0
        %952 = vmatmul.mubr.f32.gmra.mxu0 %v496
        %v953 = vpop.f32.mrf.mxu0
        %v954 = vadd.f32 %v363, %v953
        %v955 = vpop.f32.mrf.mxu0
        %v956 = vadd.f32 %v363, %v955
        %957 = vmatprep.mubr.f32.mxu0 0.0
        %958 = vmatmul.mubr.f32.gmra.mxu0 %v499
        %v959 = vpop.f32.mrf.mxu0
        %v960 = vadd.f32 %v368, %v959
        %v961 = vpop.f32.mrf.mxu0
        %v962 = vadd.f32 %v368, %v961
        %963 = vmatprep.mubr.f32.mxu0 0.0
        %964 = vmatmul.mubr.f32.gmra.mxu0 %v502
        %v965 = vpop.f32.mrf.mxu0
        %v966 = vadd.f32 %v373, %v965
        %v967 = vpop.f32.mrf.mxu0
        %v968 = vadd.f32 %v373, %v967
        %969 = vmatprep.mubr.f32.mxu0 0.0
        %970 = vmatmul.mubr.f32.gmra.mxu0 %v505
        %v971 = vpop.f32.mrf.mxu0
        %v972 = vadd.f32 %v378, %v971
        %v973 = vpop.f32.mrf.mxu0
        %v974 = vadd.f32 %v378, %v973
        %975 = vmatprep.mubr.f32.mxu0 0.0
        %976 = vmatmul.mubr.f32.gmra.mxu0 %v508
        %v977 = vpop.f32.mrf.mxu0
        %v978 = vadd.f32 %v383, %v977
        %v979 = vpop.f32.mrf.mxu0
        %v980 = vadd.f32 %v383, %v979
        %981 = vmatprep.mubr.f32.mxu0 0.0
        %982 = vmatmul.mubr.f32.gmra.mxu0 %v511
        %v983 = vpop.f32.mrf.mxu0
        %v984 = vadd.f32 %v388, %v983
        %v985 = vpop.f32.mrf.mxu0
        %v986 = vadd.f32 %v388, %v985
        %987 = vmatprep.mubr.f32.mxu0 0.0
        %988 = vmatmul.mubr.f32.gmra.mxu0 %v514
        %v989 = vpop.f32.mrf.mxu0
        %v990 = vadd.f32 %v393, %v989
        %v991 = vpop.f32.mrf.mxu0
        %v992 = vadd.f32 %v393, %v991
        %993 = vmatprep.mubr.f32.mxu0 0.0
        %994 = vmatmul.mubr.f32.gmra.mxu0 %v517
        %v995 = vpop.f32.mrf.mxu0
        %v996 = vadd.f32 %v398, %v995
        %v997 = vpop.f32.mrf.mxu0
        %v998 = vadd.f32 %v398, %v997
        %999 = vmatprep.mubr.f32.mxu0 0.0
        %1000 = vmatmul.mubr.f32.gmra.mxu0 %v520
        %v1001 = vpop.f32.mrf.mxu0
        %v1002 = vadd.f32 %v403, %v1001
        %v1003 = vpop.f32.mrf.mxu0
        %v1004 = vadd.f32 %v403, %v1003
        %1005 = vmatprep.mubr.f32.mxu0 0.0
        %1006 = vmatmul.mubr.f32.gmra.mxu0 %v523
        %v1007 = vpop.f32.mrf.mxu0
        %v1008 = vadd.f32 %v408, %v1007
        %v1009 = vpop.f32.mrf.mxu0
        %v1010 = vadd.f32 %v408, %v1009
        %1011 = vmatprep.mubr.f32.mxu0 0.0
        %1012 = vmatmul.mubr.f32.gmra.mxu0 %v526
        %v1013 = vpop.f32.mrf.mxu0
        %v1014 = vadd.f32 %v413, %v1013
        %v1015 = vpop.f32.mrf.mxu0
        %v1016 = vadd.f32 %v413, %v1015
        %1017 = vmatprep.mubr.f32.mxu0 0.0
        %1018 = vmatmul.mubr.f32.gmra.mxu0 %v529
        %v1019 = vpop.f32.mrf.mxu0
        %v1020 = vadd.f32 %v418, %v1019
        %v1021 = vpop.f32.mrf.mxu0
        %v1022 = vadd.f32 %v418, %v1021
        %1023 = vmatprep.mubr.f32.mxu0 0.0
        %1024 = vmatmul.mubr.f32.gmra.mxu0 %v532
        %v1025 = vpop.f32.mrf.mxu0
        %v1026 = vadd.f32 %v423, %v1025
        %v1027 = vpop.f32.mrf.mxu0
        %v1028 = vadd.f32 %v423, %v1027
        %1029 = vmatprep.mubr.f32.mxu0 0.0
        %1030 = vmatmul.mubr.f32.gmra.mxu0 %v535
        %v1031 = vpop.f32.mrf.mxu0
        %v1032 = vadd.f32 %v428, %v1031
        %v1033 = vpop.f32.mrf.mxu0
        %v1034 = vadd.f32 %v428, %v1033
        %1035 = vmatprep.mubr.f32.mxu0 0.0
        %1036 = vmatmul.mubr.f32.gmra.mxu0 %v538
        %v1037 = vpop.f32.mrf.mxu0
        %v1038 = vadd.f32 %v433, %v1037
        %v1039 = vpop.f32.mrf.mxu0
        %v1040 = vadd.f32 %v433, %v1039
        %1041 = vmatprep.mubr.f32.mxu0 0.0
        %1042 = vmatmul.mubr.f32.gmra.mxu0 %v541
        %v1043 = vpop.f32.mrf.mxu0
        %v1044 = vadd.f32 %v438, %v1043
        %v1045 = vpop.f32.mrf.mxu0
        %v1046 = vadd.f32 %v438, %v1045
        %1047 = vmatprep.mubr.f32.mxu0 0.0
        %1048 = vmatmul.mubr.f32.gmra.mxu0 %v544
        %v1049 = vpop.f32.mrf.mxu0
        %v1050 = vadd.f32 %v443, %v1049
        %v1051 = vpop.f32.mrf.mxu0
        %v1052 = vadd.f32 %v443, %v1051
        %1053 = vmatprep.mubr.f32.mxu0 0.0
        %1054 = vmatmul.mubr.f32.gmra.mxu0 %v547
        %v1055 = vpop.f32.mrf.mxu0
        %v1056 = vadd.f32 %v448, %v1055
        %v1057 = vpop.f32.mrf.mxu0
        %v1058 = vadd.f32 %v448, %v1057
        %1059 = vmatprep.mubr.f32.mxu0 0.0
        %1060 = vmatmul.mubr.f32.gmra.mxu0 %v550
        %v1061 = vpop.f32.mrf.mxu0
        %v1062 = vadd.f32 %v453, %v1061
        %v1063 = vpop.f32.mrf.mxu0
        %v1064 = vadd.f32 %v453, %v1063
        %1065 = vdwg.mxu0
        %v1066 = vmax.f32 %v619, 0.0
        %v1067 = vmax.f32 %v621, 0.0
        %v1068 = vmax.f32 %v876, 0.0
        %v1069 = vmax.f32 %v878, 0.0
        %v1070 = vmax.f32 %v625, 0.0
        %v1071 = vmax.f32 %v627, 0.0
        %v1072 = vmax.f32 %v882, 0.0
        %v1073 = vmax.f32 %v884, 0.0
        %v1074 = vmax.f32 %v631, 0.0
        %v1075 = vmax.f32 %v633, 0.0
        %v1076 = vmax.f32 %v888, 0.0
        %v1077 = vmax.f32 %v890, 0.0
        %v1078 = vmax.f32 %v637, 0.0
        %v1079 = vmax.f32 %v639, 0.0
        %v1080 = vmax.f32 %v894, 0.0
        %v1081 = vmax.f32 %v896, 0.0
        %v1082 = vmax.f32 %v643, 0.0
        %v1083 = vmax.f32 %v645, 0.0
        %v1084 = vmax.f32 %v900, 0.0
        %v1085 = vmax.f32 %v902, 0.0
        %v1086 = vmax.f32 %v649, 0.0
        %v1087 = vmax.f32 %v651, 0.0
        %v1088 = vmax.f32 %v906, 0.0
        %v1089 = vmax.f32 %v908, 0.0
        %v1090 = vmax.f32 %v655, 0.0
        %v1091 = vmax.f32 %v657, 0.0
        %v1092 = vmax.f32 %v912, 0.0
        %v1093 = vmax.f32 %v914, 0.0
        %v1094 = vmax.f32 %v661, 0.0
        %v1095 = vmax.f32 %v663, 0.0
        %v1096 = vmax.f32 %v918, 0.0
        %v1097 = vmax.f32 %v920, 0.0
        %v1098 = vmax.f32 %v667, 0.0
        %v1099 = vmax.f32 %v669, 0.0
        %v1100 = vmax.f32 %v924, 0.0
        %v1101 = vmax.f32 %v926, 0.0
        %v1102 = vmax.f32 %v673, 0.0
        %v1103 = vmax.f32 %v675, 0.0
        %v1104 = vmax.f32 %v930, 0.0
        %v1105 = vmax.f32 %v932, 0.0
        %v1106 = vmax.f32 %v679, 0.0
        %v1107 = vmax.f32 %v681, 0.0
        %v1108 = vmax.f32 %v936, 0.0
        %v1109 = vmax.f32 %v938, 0.0
        %v1110 = vmax.f32 %v685, 0.0
        %v1111 = vmax.f32 %v687, 0.0
        %v1112 = vmax.f32 %v942, 0.0
        %v1113 = vmax.f32 %v944, 0.0
        %v1114 = vmax.f32 %v691, 0.0
        %v1115 = vmax.f32 %v693, 0.0
        %v1116 = vmax.f32 %v948, 0.0
        %v1117 = vmax.f32 %v950, 0.0
        %v1118 = vmax.f32 %v697, 0.0
        %v1119 = vmax.f32 %v699, 0.0
        %v1120 = vmax.f32 %v954, 0.0
        %v1121 = vmax.f32 %v956, 0.0
        %v1122 = vmax.f32 %v703, 0.0
        %v1123 = vmax.f32 %v705, 0.0
        %v1124 = vmax.f32 %v960, 0.0
        %v1125 = vmax.f32 %v962, 0.0
        %v1126 = vmax.f32 %v709, 0.0
        %v1127 = vmax.f32 %v711, 0.0
        %v1128 = vmax.f32 %v966, 0.0
        %v1129 = vmax.f32 %v968, 0.0
        %v1130 = vmax.f32 %v715, 0.0
        %v1131 = vmax.f32 %v717, 0.0
        %v1132 = vmax.f32 %v972, 0.0
        %v1133 = vmax.f32 %v974, 0.0
        %v1134 = vmax.f32 %v721, 0.0
        %v1135 = vmax.f32 %v723, 0.0
        %v1136 = vmax.f32 %v978, 0.0
        %v1137 = vmax.f32 %v980, 0.0
        %v1138 = vmax.f32 %v727, 0.0
        %v1139 = vmax.f32 %v729, 0.0
        %v1140 = vmax.f32 %v984, 0.0
        %v1141 = vmax.f32 %v986, 0.0
        %v1142 = vmax.f32 %v733, 0.0
        %v1143 = vmax.f32 %v735, 0.0
        %v1144 = vmax.f32 %v990, 0.0
        %v1145 = vmax.f32 %v992, 0.0
        %v1146 = vmax.f32 %v739, 0.0
        %v1147 = vmax.f32 %v741, 0.0
        %v1148 = vmax.f32 %v996, 0.0
        %v1149 = vmax.f32 %v998, 0.0
        %v1150 = vmax.f32 %v745, 0.0
        %v1151 = vmax.f32 %v747, 0.0
        %v1152 = vmax.f32 %v1002, 0.0
        %v1153 = vmax.f32 %v1004, 0.0
        %v1154 = vmax.f32 %v751, 0.0
        %v1155 = vmax.f32 %v753, 0.0
        %v1156 = vmax.f32 %v1008, 0.0
        %v1157 = vmax.f32 %v1010, 0.0
        %v1158 = vmax.f32 %v757, 0.0
        %v1159 = vmax.f32 %v759, 0.0
        %v1160 = vmax.f32 %v1014, 0.0
        %v1161 = vmax.f32 %v1016, 0.0
        %v1162 = vmax.f32 %v763, 0.0
        %v1163 = vmax.f32 %v765, 0.0
        %v1164 = vmax.f32 %v1020, 0.0
        %v1165 = vmax.f32 %v1022, 0.0
        %v1166 = vmax.f32 %v769, 0.0
        %v1167 = vmax.f32 %v771, 0.0
        %v1168 = vmax.f32 %v1026, 0.0
        %v1169 = vmax.f32 %v1028, 0.0
        %v1170 = vmax.f32 %v775, 0.0
        %v1171 = vmax.f32 %v777, 0.0
        %v1172 = vmax.f32 %v1032, 0.0
        %v1173 = vmax.f32 %v1034, 0.0
        %v1174 = vmax.f32 %v781, 0.0
        %v1175 = vmax.f32 %v783, 0.0
        %v1176 = vmax.f32 %v1038, 0.0
        %v1177 = vmax.f32 %v1040, 0.0
        %v1178 = vmax.f32 %v787, 0.0
        %v1179 = vmax.f32 %v789, 0.0
        %v1180 = vmax.f32 %v1044, 0.0
        %v1181 = vmax.f32 %v1046, 0.0
        %v1182 = vmax.f32 %v793, 0.0
        %v1183 = vmax.f32 %v795, 0.0
        %v1184 = vmax.f32 %v1050, 0.0
        %v1185 = vmax.f32 %v1052, 0.0
        %v1186 = vmax.f32 %v799, 0.0
        %v1187 = vmax.f32 %v801, 0.0
        %v1188 = vmax.f32 %v1056, 0.0
        %v1189 = vmax.f32 %v1058, 0.0
        %v1190 = vmax.f32 %v805, 0.0
        %v1191 = vmax.f32 %v807, 0.0
        %v1192 = vmax.f32 %v1062, 0.0
        %v1193 = vmax.f32 %v1064, 0.0
        %v1194 = vld [vmem:[%s3] sm:$0xff]
        %v1195 = vld [vmem:[%s3 + $0x8] sm:$0xff]
        %v1196 = vld [vmem:[%s3 + $0x10] sm:$0xff]
        %v1197 = vld [vmem:[%s3 + $0x18] sm:$0xff]
        %v1198 = vld [vmem:[%s3 + $0x20] sm:$0xff]
        %v1199 = vld [vmem:[%s3 + $0x28] sm:$0xff]
        %v1200 = vld [vmem:[%s3 + $0x30] sm:$0xff]
        %v1201 = vld [vmem:[%s3 + $0x38] sm:$0xff]
        %v1202 = vld [vmem:[%s3 + $0x40] sm:$0xff]
        %v1203 = vld [vmem:[%s3 + $0x48] sm:$0xff]
        %v1204 = vld [vmem:[%s3 + $0x50] sm:$0xff]
        %v1205 = vld [vmem:[%s3 + $0x58] sm:$0xff]
        %v1206 = vld [vmem:[%s3 + $0x60] sm:$0xff]
        %v1207 = vld [vmem:[%s3 + $0x68] sm:$0xff]
        %v1208 = vld [vmem:[%s3 + $0x70] sm:$0xff]
        %v1209 = vld [vmem:[%s3 + $0x78] sm:$0xff]
        %v1210 = vld [vmem:[%s3 + $0x80] sm:$0xff]
        %v1211 = vld [vmem:[%s3 + $0x88] sm:$0xff]
        %v1212 = vld [vmem:[%s3 + $0x90] sm:$0xff]
        %v1213 = vld [vmem:[%s3 + $0x98] sm:$0xff]
        %v1214 = vld [vmem:[%s3 + $0xa0] sm:$0xff]
        %v1215 = vld [vmem:[%s3 + $0xa8] sm:$0xff]
        %v1216 = vld [vmem:[%s3 + $0xb0] sm:$0xff]
        %v1217 = vld [vmem:[%s3 + $0xb8] sm:$0xff]
        %v1218 = vld [vmem:[%s3 + $0xc0] sm:$0xff]
        %v1219 = vld [vmem:[%s3 + $0xc8] sm:$0xff]
        %v1220 = vld [vmem:[%s3 + $0xd0] sm:$0xff]
        %v1221 = vld [vmem:[%s3 + $0xd8] sm:$0xff]
        %v1222 = vld [vmem:[%s3 + $0xe0] sm:$0xff]
        %v1223 = vld [vmem:[%s3 + $0xe8] sm:$0xff]
        %v1224 = vld [vmem:[%s3 + $0xf0] sm:$0xff]
        %v1225 = vld [vmem:[%s3 + $0xf8] sm:$0xff]
        %1227 = vset.pattern.permute.xlu0 0
        %1228 = vperm.xlu0 %1227, %v1194
        %v1229 = vpop.permute.xlu0 %1228
        %1232 = vset.pattern.permute.xlu0 0
        %1233 = vperm.xlu0 %1232, %v1195
        %v1234 = vpop.permute.xlu0 %1233
        %1237 = vset.pattern.permute.xlu0 0
        %1238 = vperm.xlu0 %1237, %v1196
        %v1239 = vpop.permute.xlu0 %1238
        %1242 = vset.pattern.permute.xlu0 0
        %1243 = vperm.xlu0 %1242, %v1197
        %v1244 = vpop.permute.xlu0 %1243
        %1247 = vset.pattern.permute.xlu0 0
        %1248 = vperm.xlu0 %1247, %v1198
        %v1249 = vpop.permute.xlu0 %1248
        %1252 = vset.pattern.permute.xlu0 0
        %1253 = vperm.xlu0 %1252, %v1199
        %v1254 = vpop.permute.xlu0 %1253
        %1257 = vset.pattern.permute.xlu0 0
        %1258 = vperm.xlu0 %1257, %v1200
        %v1259 = vpop.permute.xlu0 %1258
        %1262 = vset.pattern.permute.xlu0 0
        %1263 = vperm.xlu0 %1262, %v1201
        %v1264 = vpop.permute.xlu0 %1263
        %1267 = vset.pattern.permute.xlu0 0
        %1268 = vperm.xlu0 %1267, %v1202
        %v1269 = vpop.permute.xlu0 %1268
        %1272 = vset.pattern.permute.xlu0 0
        %1273 = vperm.xlu0 %1272, %v1203
        %v1274 = vpop.permute.xlu0 %1273
        %1277 = vset.pattern.permute.xlu0 0
        %1278 = vperm.xlu0 %1277, %v1204
        %v1279 = vpop.permute.xlu0 %1278
        %1282 = vset.pattern.permute.xlu0 0
        %1283 = vperm.xlu0 %1282, %v1205
        %v1284 = vpop.permute.xlu0 %1283
        %1287 = vset.pattern.permute.xlu0 0
        %1288 = vperm.xlu0 %1287, %v1206
        %v1289 = vpop.permute.xlu0 %1288
        %1292 = vset.pattern.permute.xlu0 0
        %1293 = vperm.xlu0 %1292, %v1207
        %v1294 = vpop.permute.xlu0 %1293
        %1297 = vset.pattern.permute.xlu0 0
        %1298 = vperm.xlu0 %1297, %v1208
        %v1299 = vpop.permute.xlu0 %1298
        %1302 = vset.pattern.permute.xlu0 0
        %1303 = vperm.xlu0 %1302, %v1209
        %v1304 = vpop.permute.xlu0 %1303
        %1307 = vset.pattern.permute.xlu0 0
        %1308 = vperm.xlu0 %1307, %v1210
        %v1309 = vpop.permute.xlu0 %1308
        %1312 = vset.pattern.permute.xlu0 0
        %1313 = vperm.xlu0 %1312, %v1211
        %v1314 = vpop.permute.xlu0 %1313
        %1317 = vset.pattern.permute.xlu0 0
        %1318 = vperm.xlu0 %1317, %v1212
        %v1319 = vpop.permute.xlu0 %1318
        %1322 = vset.pattern.permute.xlu0 0
        %1323 = vperm.xlu0 %1322, %v1213
        %v1324 = vpop.permute.xlu0 %1323
        %1327 = vset.pattern.permute.xlu0 0
        %1328 = vperm.xlu0 %1327, %v1214
        %v1329 = vpop.permute.xlu0 %1328
        %1332 = vset.pattern.permute.xlu0 0
        %1333 = vperm.xlu0 %1332, %v1215
        %v1334 = vpop.permute.xlu0 %1333
        %1337 = vset.pattern.permute.xlu0 0
        %1338 = vperm.xlu0 %1337, %v1216
        %v1339 = vpop.permute.xlu0 %1338
        %1342 = vset.pattern.permute.xlu0 0
        %1343 = vperm.xlu0 %1342, %v1217
        %v1344 = vpop.permute.xlu0 %1343
        %1347 = vset.pattern.permute.xlu0 0
        %1348 = vperm.xlu0 %1347, %v1218
        %v1349 = vpop.permute.xlu0 %1348
        %1352 = vset.pattern.permute.xlu0 0
        %1353 = vperm.xlu0 %1352, %v1219
        %v1354 = vpop.permute.xlu0 %1353
        %1357 = vset.pattern.permute.xlu0 0
        %1358 = vperm.xlu0 %1357, %v1220
        %v1359 = vpop.permute.xlu0 %1358
        %1362 = vset.pattern.permute.xlu0 0
        %1363 = vperm.xlu0 %1362, %v1221
        %v1364 = vpop.permute.xlu0 %1363
        %1367 = vset.pattern.permute.xlu0 0
        %1368 = vperm.xlu0 %1367, %v1222
        %v1369 = vpop.permute.xlu0 %1368
        %1372 = vset.pattern.permute.xlu0 0
        %1373 = vperm.xlu0 %1372, %v1223
        %v1374 = vpop.permute.xlu0 %1373
        %1377 = vset.pattern.permute.xlu0 0
        %1378 = vperm.xlu0 %1377, %v1224
        %v1379 = vpop.permute.xlu0 %1378
        %1382 = vset.pattern.permute.xlu0 0
        %1383 = vperm.xlu0 %1382, %v1225
        %v1384 = vpop.permute.xlu0 %1383
        %v1386 = vmul.f32 %v1066, %v1229
        %v1387 = vmul.f32 %v1067, %v1229
        %v1388 = vmul.f32 %v1068, %v1229
        %v1389 = vmul.f32 %v1069, %v1229
        %v1390 = vmul.f32 %v1070, %v1234
        %v1391 = vmul.f32 %v1071, %v1234
        %v1392 = vmul.f32 %v1072, %v1234
        %v1393 = vmul.f32 %v1073, %v1234
        %v1394 = vmul.f32 %v1074, %v1239
        %v1395 = vmul.f32 %v1075, %v1239
        %v1396 = vmul.f32 %v1076, %v1239
        %v1397 = vmul.f32 %v1077, %v1239
        %v1398 = vmul.f32 %v1078, %v1244
        %v1399 = vmul.f32 %v1079, %v1244
        %v1400 = vmul.f32 %v1080, %v1244
        %v1401 = vmul.f32 %v1081, %v1244
        %v1402 = vmul.f32 %v1082, %v1249
        %v1403 = vmul.f32 %v1083, %v1249
        %v1404 = vmul.f32 %v1084, %v1249
        %v1405 = vmul.f32 %v1085, %v1249
        %v1406 = vmul.f32 %v1086, %v1254
        %v1407 = vmul.f32 %v1087, %v1254
        %v1408 = vmul.f32 %v1088, %v1254
        %v1409 = vmul.f32 %v1089, %v1254
        %v1410 = vmul.f32 %v1090, %v1259
        %v1411 = vmul.f32 %v1091, %v1259
        %v1412 = vmul.f32 %v1092, %v1259
        %v1413 = vmul.f32 %v1093, %v1259
        %v1414 = vmul.f32 %v1094, %v1264
        %v1415 = vmul.f32 %v1095, %v1264
        %v1416 = vmul.f32 %v1096, %v1264
        %v1417 = vmul.f32 %v1097, %v1264
        %v1418 = vmul.f32 %v1098, %v1269
        %v1419 = vmul.f32 %v1099, %v1269
        %v1420 = vmul.f32 %v1100, %v1269
        %v1421 = vmul.f32 %v1101, %v1269
        %v1422 = vmul.f32 %v1102, %v1274
        %v1423 = vmul.f32 %v1103, %v1274
        %v1424 = vmul.f32 %v1104, %v1274
        %v1425 = vmul.f32 %v1105, %v1274
        %v1426 = vmul.f32 %v1106, %v1279
        %v1427 = vmul.f32 %v1107, %v1279
        %v1428 = vmul.f32 %v1108, %v1279
        %v1429 = vmul.f32 %v1109, %v1279
        %v1430 = vmul.f32 %v1110, %v1284
        %v1431 = vmul.f32 %v1111, %v1284
        %v1432 = vmul.f32 %v1112, %v1284
        %v1433 = vmul.f32 %v1113, %v1284
        %v1434 = vmul.f32 %v1114, %v1289
        %v1435 = vmul.f32 %v1115, %v1289
        %v1436 = vmul.f32 %v1116, %v1289
        %v1437 = vmul.f32 %v1117, %v1289
        %v1438 = vmul.f32 %v1118, %v1294
        %v1439 = vmul.f32 %v1119, %v1294
        %v1440 = vmul.f32 %v1120, %v1294
        %v1441 = vmul.f32 %v1121, %v1294
        %v1442 = vmul.f32 %v1122, %v1299
        %v1443 = vmul.f32 %v1123, %v1299
        %v1444 = vmul.f32 %v1124, %v1299
        %v1445 = vmul.f32 %v1125, %v1299
        %v1446 = vmul.f32 %v1126, %v1304
        %v1447 = vmul.f32 %v1127, %v1304
        %v1448 = vmul.f32 %v1128, %v1304
        %v1449 = vmul.f32 %v1129, %v1304
        %v1450 = vmul.f32 %v1130, %v1309
        %v1451 = vmul.f32 %v1131, %v1309
        %v1452 = vmul.f32 %v1132, %v1309
        %v1453 = vmul.f32 %v1133, %v1309
        %v1454 = vmul.f32 %v1134, %v1314
        %v1455 = vmul.f32 %v1135, %v1314
        %v1456 = vmul.f32 %v1136, %v1314
        %v1457 = vmul.f32 %v1137, %v1314
        %v1458 = vmul.f32 %v1138, %v1319
        %v1459 = vmul.f32 %v1139, %v1319
        %v1460 = vmul.f32 %v1140, %v1319
        %v1461 = vmul.f32 %v1141, %v1319
        %v1462 = vmul.f32 %v1142, %v1324
        %v1463 = vmul.f32 %v1143, %v1324
        %v1464 = vmul.f32 %v1144, %v1324
        %v1465 = vmul.f32 %v1145, %v1324
        %v1466 = vmul.f32 %v1146, %v1329
        %v1467 = vmul.f32 %v1147, %v1329
        %v1468 = vmul.f32 %v1148, %v1329
        %v1469 = vmul.f32 %v1149, %v1329
        %v1470 = vmul.f32 %v1150, %v1334
        %v1471 = vmul.f32 %v1151, %v1334
        %v1472 = vmul.f32 %v1152, %v1334
        %v1473 = vmul.f32 %v1153, %v1334
        %v1474 = vmul.f32 %v1154, %v1339
        %v1475 = vmul.f32 %v1155, %v1339
        %v1476 = vmul.f32 %v1156, %v1339
        %v1477 = vmul.f32 %v1157, %v1339
        %v1478 = vmul.f32 %v1158, %v1344
        %v1479 = vmul.f32 %v1159, %v1344
        %v1480 = vmul.f32 %v1160, %v1344
        %v1481 = vmul.f32 %v1161, %v1344
        %v1482 = vmul.f32 %v1162, %v1349
        %v1483 = vmul.f32 %v1163, %v1349
        %v1484 = vmul.f32 %v1164, %v1349
        %v1485 = vmul.f32 %v1165, %v1349
        %v1486 = vmul.f32 %v1166, %v1354
        %v1487 = vmul.f32 %v1167, %v1354
        %v1488 = vmul.f32 %v1168, %v1354
        %v1489 = vmul.f32 %v1169, %v1354
        %v1490 = vmul.f32 %v1170, %v1359
        %v1491 = vmul.f32 %v1171, %v1359
        %v1492 = vmul.f32 %v1172, %v1359
        %v1493 = vmul.f32 %v1173, %v1359
        %v1494 = vmul.f32 %v1174, %v1364
        %v1495 = vmul.f32 %v1175, %v1364
        %v1496 = vmul.f32 %v1176, %v1364
        %v1497 = vmul.f32 %v1177, %v1364
        %v1498 = vmul.f32 %v1178, %v1369
        %v1499 = vmul.f32 %v1179, %v1369
        %v1500 = vmul.f32 %v1180, %v1369
        %v1501 = vmul.f32 %v1181, %v1369
        %v1502 = vmul.f32 %v1182, %v1374
        %v1503 = vmul.f32 %v1183, %v1374
        %v1504 = vmul.f32 %v1184, %v1374
        %v1505 = vmul.f32 %v1185, %v1374
        %v1506 = vmul.f32 %v1186, %v1379
        %v1507 = vmul.f32 %v1187, %v1379
        %v1508 = vmul.f32 %v1188, %v1379
        %v1509 = vmul.f32 %v1189, %v1379
        %v1510 = vmul.f32 %v1190, %v1384
        %v1511 = vmul.f32 %v1191, %v1384
        %v1512 = vmul.f32 %v1192, %v1384
        %v1513 = vmul.f32 %v1193, %v1384
        %v1514 = vadd.f32 %v1386, %v1390
        %v1515 = vadd.f32 %v1514, %v1394
        %v1516 = vadd.f32 %v1515, %v1398
        %v1517 = vadd.f32 %v1516, %v1402
        %v1518 = vadd.f32 %v1517, %v1406
        %v1519 = vadd.f32 %v1518, %v1410
        %v1520 = vadd.f32 %v1519, %v1414
        %v1521 = vadd.f32 %v1520, %v1418
        %v1522 = vadd.f32 %v1521, %v1422
        %v1523 = vadd.f32 %v1522, %v1426
        %v1524 = vadd.f32 %v1523, %v1430
        %v1525 = vadd.f32 %v1524, %v1434
        %v1526 = vadd.f32 %v1525, %v1438
        %v1527 = vadd.f32 %v1526, %v1442
        %v1528 = vadd.f32 %v1527, %v1446
        %v1529 = vadd.f32 %v1528, %v1450
        %v1530 = vadd.f32 %v1529, %v1454
        %v1531 = vadd.f32 %v1530, %v1458
        %v1532 = vadd.f32 %v1531, %v1462
        %v1533 = vadd.f32 %v1532, %v1466
        %v1534 = vadd.f32 %v1533, %v1470
        %v1535 = vadd.f32 %v1534, %v1474
        %v1536 = vadd.f32 %v1535, %v1478
        %v1537 = vadd.f32 %v1536, %v1482
        %v1538 = vadd.f32 %v1537, %v1486
        %v1539 = vadd.f32 %v1538, %v1490
        %v1540 = vadd.f32 %v1539, %v1494
        %v1541 = vadd.f32 %v1540, %v1498
        %v1542 = vadd.f32 %v1541, %v1502
        %v1543 = vadd.f32 %v1542, %v1506
        %v1544 = vadd.f32 %v1543, %v1510
        %v1545 = vrot.slane %v1544, 4
        %v1546 = vadd.f32 %v1544, %v1545
        %v1547 = vrot.slane %v1546, 2
        %v1548 = vadd.f32 %v1546, %v1547
        %v1549 = vrot.slane %v1548, 1
        %v1550 = vadd.f32 %v1548, %v1549
        %v1551 = vadd.f32 %v1387, %v1391
        %v1552 = vadd.f32 %v1551, %v1395
        %v1553 = vadd.f32 %v1552, %v1399
        %v1554 = vadd.f32 %v1553, %v1403
        %v1555 = vadd.f32 %v1554, %v1407
        %v1556 = vadd.f32 %v1555, %v1411
        %v1557 = vadd.f32 %v1556, %v1415
        %v1558 = vadd.f32 %v1557, %v1419
        %v1559 = vadd.f32 %v1558, %v1423
        %v1560 = vadd.f32 %v1559, %v1427
        %v1561 = vadd.f32 %v1560, %v1431
        %v1562 = vadd.f32 %v1561, %v1435
        %v1563 = vadd.f32 %v1562, %v1439
        %v1564 = vadd.f32 %v1563, %v1443
        %v1565 = vadd.f32 %v1564, %v1447
        %v1566 = vadd.f32 %v1565, %v1451
        %v1567 = vadd.f32 %v1566, %v1455
        %v1568 = vadd.f32 %v1567, %v1459
        %v1569 = vadd.f32 %v1568, %v1463
        %v1570 = vadd.f32 %v1569, %v1467
        %v1571 = vadd.f32 %v1570, %v1471
        %v1572 = vadd.f32 %v1571, %v1475
        %v1573 = vadd.f32 %v1572, %v1479
        %v1574 = vadd.f32 %v1573, %v1483
        %v1575 = vadd.f32 %v1574, %v1487
        %v1576 = vadd.f32 %v1575, %v1491
        %v1577 = vadd.f32 %v1576, %v1495
        %v1578 = vadd.f32 %v1577, %v1499
        %v1579 = vadd.f32 %v1578, %v1503
        %v1580 = vadd.f32 %v1579, %v1507
        %v1581 = vadd.f32 %v1580, %v1511
        %v1582 = vrot.slane %v1581, 4
        %v1583 = vadd.f32 %v1581, %v1582
        %v1584 = vrot.slane %v1583, 2
        %v1585 = vadd.f32 %v1583, %v1584
        %v1586 = vrot.slane %v1585, 1
        %v1587 = vadd.f32 %v1585, %v1586
        %v1588 = vadd.f32 %v1388, %v1392
        %v1589 = vadd.f32 %v1588, %v1396
        %v1590 = vadd.f32 %v1589, %v1400
        %v1591 = vadd.f32 %v1590, %v1404
        %v1592 = vadd.f32 %v1591, %v1408
        %v1593 = vadd.f32 %v1592, %v1412
        %v1594 = vadd.f32 %v1593, %v1416
        %v1595 = vadd.f32 %v1594, %v1420
        %v1596 = vadd.f32 %v1595, %v1424
        %v1597 = vadd.f32 %v1596, %v1428
        %v1598 = vadd.f32 %v1597, %v1432
        %v1599 = vadd.f32 %v1598, %v1436
        %v1600 = vadd.f32 %v1599, %v1440
        %v1601 = vadd.f32 %v1600, %v1444
        %v1602 = vadd.f32 %v1601, %v1448
        %v1603 = vadd.f32 %v1602, %v1452
        %v1604 = vadd.f32 %v1603, %v1456
        %v1605 = vadd.f32 %v1604, %v1460
        %v1606 = vadd.f32 %v1605, %v1464
        %v1607 = vadd.f32 %v1606, %v1468
        %v1608 = vadd.f32 %v1607, %v1472
        %v1609 = vadd.f32 %v1608, %v1476
        %v1610 = vadd.f32 %v1609, %v1480
        %v1611 = vadd.f32 %v1610, %v1484
        %v1612 = vadd.f32 %v1611, %v1488
        %v1613 = vadd.f32 %v1612, %v1492
        %v1614 = vadd.f32 %v1613, %v1496
        %v1615 = vadd.f32 %v1614, %v1500
        %v1616 = vadd.f32 %v1615, %v1504
        %v1617 = vadd.f32 %v1616, %v1508
        %v1618 = vadd.f32 %v1617, %v1512
        %v1619 = vrot.slane %v1618, 4
        %v1620 = vadd.f32 %v1618, %v1619
        %v1621 = vrot.slane %v1620, 2
        %v1622 = vadd.f32 %v1620, %v1621
        %v1623 = vrot.slane %v1622, 1
        %v1624 = vadd.f32 %v1622, %v1623
        %v1625 = vadd.f32 %v1389, %v1393
        %v1626 = vadd.f32 %v1625, %v1397
        %v1627 = vadd.f32 %v1626, %v1401
        %v1628 = vadd.f32 %v1627, %v1405
        %v1629 = vadd.f32 %v1628, %v1409
        %v1630 = vadd.f32 %v1629, %v1413
        %v1631 = vadd.f32 %v1630, %v1417
        %v1632 = vadd.f32 %v1631, %v1421
        %v1633 = vadd.f32 %v1632, %v1425
        %v1634 = vadd.f32 %v1633, %v1429
        %v1635 = vadd.f32 %v1634, %v1433
        %v1636 = vadd.f32 %v1635, %v1437
        %v1637 = vadd.f32 %v1636, %v1441
        %v1638 = vadd.f32 %v1637, %v1445
        %v1639 = vadd.f32 %v1638, %v1449
        %v1640 = vadd.f32 %v1639, %v1453
        %v1641 = vadd.f32 %v1640, %v1457
        %v1642 = vadd.f32 %v1641, %v1461
        %v1643 = vadd.f32 %v1642, %v1465
        %v1644 = vadd.f32 %v1643, %v1469
        %v1645 = vadd.f32 %v1644, %v1473
        %v1646 = vadd.f32 %v1645, %v1477
        %v1647 = vadd.f32 %v1646, %v1481
        %v1648 = vadd.f32 %v1647, %v1485
        %v1649 = vadd.f32 %v1648, %v1489
        %v1650 = vadd.f32 %v1649, %v1493
        %v1651 = vadd.f32 %v1650, %v1497
        %v1652 = vadd.f32 %v1651, %v1501
        %v1653 = vadd.f32 %v1652, %v1505
        %v1654 = vadd.f32 %v1653, %v1509
        %v1655 = vadd.f32 %v1654, %v1513
        %v1656 = vrot.slane %v1655, 4
        %v1657 = vadd.f32 %v1655, %v1656
        %v1658 = vrot.slane %v1657, 2
        %v1659 = vadd.f32 %v1657, %v1658
        %v1660 = vrot.slane %v1659, 1
        %v1661 = vadd.f32 %v1659, %v1660
        %s1662 = sld [smem:[#allocation2]]
        %v1663 = vstv %s1662
        %v1664 = vadd.f32 %v1550, %v1663
        %v1665 = vadd.f32 %v1587, %v1663
        %v1666 = vadd.f32 %v1624, %v1663
        %v1667 = vadd.f32 %v1661, %v1663
        %v1668 = vsub.f32 0.0, %v1664
        %v1669 = vsub.f32 0.0, %v1665
        %v1670 = vsub.f32 0.0, %v1666
        %v1671 = vsub.f32 0.0, %v1667
        %v1672 = vmul.f32 %v1668, 1.442695
        %v1673 = vpow.pop %v1672
        %v1674 = vmul.f32 %v1669, 1.442695
        %v1675 = vpow.pop %v1674
        %v1676 = vmul.f32 %v1670, 1.442695
        %v1677 = vpow.pop %v1676
        %v1678 = vmul.f32 %v1671, 1.442695
        %v1679 = vpow.pop %v1678
        %v1680 = vadd.f32 %v1673, 1.0
        %v1681 = vadd.f32 %v1675, 1.0
        %v1682 = vadd.f32 %v1677, 1.0
        %v1683 = vadd.f32 %v1679, 1.0
        %v1684 = vrcp.pop %v1680
        %v1685 = vmul.f32 1.0, %v1684
        %v1686 = vrcp.pop %v1681
        %v1687 = vmul.f32 1.0, %v1686
        %v1688 = vrcp.pop %v1682
        %v1689 = vmul.f32 1.0, %v1688
        %v1690 = vrcp.pop %v1683
        %v1691 = vmul.f32 1.0, %v1690
        %v1696 = vcombine.low %v1685, %v1687
        %v1697 = vcombine.low %v1689, %v1691
        %v1699 = vunpack.c.l.s4 1966171168
        %v1700 = vunpack.c.0.s8 %v1699
        %v1701 = vlaneseq
        %v1702 = vshrl.u32 %v1701, 7
        %v1703 = vsub.s32 %v1700, %v1702
        %v1704 = vrot.slane %v1696, %v1703
        %v1706 = vunpack.c.l.s4 1966171168
        %v1707 = vunpack.c.0.s8 %v1706
        %v1708 = vlaneseq
        %v1709 = vshrl.u32 %v1708, 7
        %v1710 = vsub.s32 %v1707, %v1709
        %v1711 = vrot.slane %v1697, %v1710
        %v1712 = vcombine.low %v1704, %v1711
        %v1714 = vunpack.c.l.s4 1966171168
        %v1715 = vunpack.c.0.s8 %v1714
        %v1716 = vlaneseq
        %v1717 = vshrl.u32 %v1716, 7
        %v1718 = vsub.s32 %v1715, %v1717
        %v1719 = vrot.slane %v1712, %v1718
        %v1721 = vlaneseq
        %vm1722 = vcmp.ge.s32.totalorder %v1721, 0
        %vm1723 = vcmp.lt.s32.totalorder %v1721, 512
        %vm1724 = vmand %vm1722, %vm1723
        %1725 = vst.msk [vmem:[%s219] sm:$0xf] %vm1724, %v1719
        %s1726 = sand.u32 %s138, 1
        %s1727 = scalar_lea.sflag [#allocation4], %s1726
        %s1728 = sand.u32 %s138, 1
        %s1729 = smul.addr %s1728, 4
        %s1730 = scalar_lea.vmem [#allocation3], %s1729
        // Predicated region
        $region41: #{tpu_custom_call.1} parent=39 // pred_check
          %p1731 = pneg %p148
        $region42: #{tpu_custom_call.1} parent=39 // pred_check_branch
          %1733 = sbr.rel (%p1731) target = $region44
        $region43: #{tpu_custom_call.1} parent=39 // pred_region
          %s1734 = smul.u32 4, %s20
          %s1736 = ssub.s32 64, 64
          %1737 = vsyncadd %s1727, %s1736
          %s1738 = smul.addr %s1734, 16
          %s1739 = scalar_lea.hbm %s5, %s1738
          %s1741 = sshll.u32 %s1730, 4
          %s1742 = int_to_ptr.vmem [resolvable:$true] %s1741
          %1744 = dma.vmem_to_hbm [thread:$0]  %s1742, 64, %s1739, %s1727
        $region44: #{tpu_custom_call.1} parent=39 // pred_fallthru
          _
      $region40: #{tpu_custom_call.1} parent=5 // pred_fallthru
        _
      %p1745 = scmp.le.s32.totalorder 2, %s15
      // Predicated region
      $region45: #{tpu_custom_call.1} parent=5 // pred_check
        %p1746 = pneg %p1745
      $region46: #{tpu_custom_call.1} parent=5 // pred_check_branch
        %1748 = sbr.rel (%p1746) target = $region48
      $region47: #{tpu_custom_call.1} parent=5 // pred_region
        %s1749 = ssub.s32 %s15, 2
        // Predicated region
        $region49: #{tpu_custom_call.1} parent=47 // pred_check
          %p1750 = pneg %p154
        $region50: #{tpu_custom_call.1} parent=47 // pred_check_branch
          %1752 = sbr.rel (%p1750) target = $region52
        $region51: #{tpu_custom_call.1} parent=47 // pred_region
          %s1753 = sand.u32 %s139, 1
          %s1754 = scalar_lea.sflag [#allocation4], %s1753
          %s1755 = sand.u32 %s139, 1
          %s1756 = smul.addr %s1755, 4
          %s1757 = scalar_lea.vmem [#allocation3], %s1756
          %1758 = dma.done %s1754, 64
        $region52: #{tpu_custom_call.1} parent=47 // pred_fallthru
          _
      $region48: #{tpu_custom_call.1} parent=5 // pred_fallthru
        _
    $region6: #{tpu_custom_call.1} parent=1 // loop_footer
      %s19 = sadd.s32 1, %s15
    $region7: #{tpu_custom_call.1} parent=1 // loop_footer_branch
      %14 = sbr.rel target = $region3
    $region8: #{tpu_custom_call.1} parent=1 // loop_exit
      _
    %1759 = vsyncpa [#allocation4], 1
    %s1760 = scalar_lea.sflag [#allocation4], 1
    %1761 = vsyncpa %s1760, 1

</llo_original>
